<compile_context>
chip_gen: v6e
topology: v6e:2x2x1
jax: 0.10.0
libtpu: 0.0.40
codegen_flags: <defaults>
</compile_context>

<pallas_src>
import jax
import jax.numpy as jnp
from jax.experimental import pallas as pl
from jax.experimental.pallas import tpu as pltpu

EPS = 1e-5
LANE = 128


# ----------------------------- kernel -----------------------------------------
def classifier_kernel(x_ref, w1_ref, gb_ref, w2_ref, b2_ref, o_ref):
    j = pl.program_id(0)
    tile_h = w1_ref.shape[1]

    @pl.when(j == 0)
    def _():
        # Initialize the grid-resident f32 output block with the Linear2 bias.
        o_ref[...] = jnp.broadcast_to(b2_ref[...], o_ref.shape)

    # ---- Linear1, one hidden column tile: (B, in_dim) @ (in_dim, tile_h) -----
    # b1 is folded away: exactly cancelled by the BN mean subtraction below.
    h = jnp.dot(x_ref[...], w1_ref[...], preferred_element_type=jnp.float32)

    # ---- BatchNorm1d (training-mode batch stats, biased variance) + ReLU -----
    # gamma/beta are resident as one (2, hidden) f32 array; slice this tile.
    if tile_h == gb_ref.shape[1]:          # single-step path: read it whole
        gb = gb_ref[...]
    else:                                   # multi-step: lane-aligned dynamic slice
        start = pl.multiple_of(j * tile_h, tile_h)
        gb = gb_ref[:, pl.ds(start, tile_h)]
    gamma, beta = gb[0:1, :], gb[1:2, :]

    mean = jnp.mean(h, axis=0, keepdims=True)          # (1, tile_h)
    hc = h - mean
    var = jnp.mean(hc * hc, axis=0, keepdims=True)     # two-pass: no cancellation
    scale = gamma * jax.lax.rsqrt(var + EPS)            # gamma folded into rsqrt
    h_relu = jnp.maximum(hc * scale + beta, 0.0)        # ReLU

    # ---- Linear2: accumulate this tile's contribution into o_ref (f32) -------
    o_ref[...] += jnp.dot(h_relu.astype(w2_ref.dtype), w2_ref[...],
                          preferred_element_type=jnp.float32)


# ----------------------------- VMEM budgeting ----------------------------------
def _tpu_vmem_capacity():
    try:
        return int(pltpu.get_tpu_info().vmem_capacity_bytes)
    except Exception:
        return 64 << 20  # conservative (v7x-sized) fallback


def _vmem_estimate(B, in_dim, hidden, tile_h, n_cls, bytes_w):
    """Conservative footprint: 2 buffers per BlockSpec'd operand (Pallas
    double-buffers even constant-index blocks) + the f32 intermediates."""
    dbl = 2
    return (dbl * B * in_dim * bytes_w             # x (resident, still 2 bufs)
            + dbl * in_dim * tile_h * bytes_w      # w1 column tile
            + dbl * 2 * hidden * 4                 # gamma/beta (resident)
            + dbl * tile_h * n_cls * bytes_w       # w2 row tile (unpadded)
            + dbl * 1 * max(n_cls, LANE) * 4       # b2
            + dbl * B * max(n_cls, LANE) * 4       # output block
            + 2 * B * tile_h * 4)                  # h / h_relu intermediates


def _pick_tile_h(B, in_dim, hidden, n_cls, bytes_w, budget):
    # Single grid step (tile_h == hidden) whenever it fits -> minimal overhead.
    if _vmem_estimate(B, in_dim, hidden, hidden, n_cls, bytes_w) <= budget:
        return hidden
    # Otherwise the largest MXU-friendly divisor that fits (prefer 256-multiples).
    c256 = [t for t in range(2 * LANE, hidden, 2 * LANE) if hidden % t == 0]
    c128 = [t for t in range(LANE, hidden, LANE) if hidden % t == 0]
    for cands in (c256, c128):
        fits = [t for t in cands
                if _vmem_estimate(B, in_dim, hidden, t, n_cls, bytes_w) <= budget]
        if fits:
            return max(fits)
    return min(c128) if c128 else hidden


# ----------------------------- wrapper ------------------------------------------
def prepare_params(params, *, use_bf16=True):
    """One-time prep (hoisted out of the hot path): matmul-dtype casts and
    gamma/beta packing.  b1 is dropped: exact no-op under training-mode BN."""
    mm_dtype = jnp.bfloat16 if use_bf16 else jnp.float32
    gb = jnp.concatenate([params["gamma"].astype(jnp.float32),
                          params["beta"].astype(jnp.float32)], axis=0)   # (2, hidden)
    return {
        "w1": params["w1"].astype(mm_dtype),      # (in_dim, hidden)
        "w2": params["w2"].astype(mm_dtype),      # (hidden, n_cls), unpadded
        "b2": params["b2"].astype(jnp.float32),   # (1, n_cls)
        "gb": gb,                                 # (2, hidden) f32
    }


def classifier_forward(x, prep, *, tile_h=None):
    """x: (B, in_dim).  prep: dict from prepare_params (pre-cast weights)."""
    w1, w2, b2, gb = prep["w1"], prep["w2"], prep["b2"], prep["gb"]
    B, in_dim = x.shape
    hidden, n_cls = w2.shape
    mm_dtype = w1.dtype
    bytes_w = jnp.dtype(mm_dtype).itemsize

    x_k = x.astype(mm_dtype)

    # Generation-aware VMEM budgeting (v7x: 64 MiB/TC; v5e/v6e: 128 MiB).
    small_vmem = _tpu_vmem_capacity() <= (64 << 20)
    budget = (24 << 20) if small_vmem else (48 << 20)
    limit_cap = (28 << 20) if small_vmem else (64 << 20)

    if tile_h is None:
        tile_h = _pick_tile_h(B, in_dim, hidden, n_cls, bytes_w, budget)
    assert hidden % tile_h == 0, "tile_h must divide hidden"
    assert tile_h == hidden or tile_h % LANE == 0, "tile_h must be lane-aligned"
    grid = (hidden // tile_h,)

    est = _vmem_estimate(B, in_dim, hidden, tile_h, n_cls, bytes_w)
    vmem_limit = int(min(max(2 * est, 16 << 20), limit_cap))

    cost = pl.CostEstimate(
        flops=int(2 * B * in_dim * hidden + 2 * B * hidden * n_cls + 8 * B * hidden),
        transcendentals=int(hidden),                       # rsqrt per feature
        bytes_accessed=int(x_k.size * bytes_w + w1.size * bytes_w
                           + w2.size * bytes_w + gb.size * 4 + b2.size * 4
                           + B * n_cls * 4),
    )

    return pl.pallas_call(
        classifier_kernel,
        out_shape=jax.ShapeDtypeStruct((B, n_cls), jnp.float32),
        grid_spec=pltpu.PrefetchScalarGridSpec(
            num_scalar_prefetch=0,
            grid=grid,
            in_specs=[
                pl.BlockSpec((B, in_dim), lambda j: (0, 0)),        # x (resident)
                pl.BlockSpec((in_dim, tile_h), lambda j: (0, j)),   # w1 column tile
                pl.BlockSpec((2, hidden), lambda j: (0, 0)),        # gamma/beta (resident)
                pl.BlockSpec((tile_h, n_cls), lambda j: (j, 0)),    # w2 row tile (unpadded)
                pl.BlockSpec((1, n_cls), lambda j: (0, 0)),         # b2 (resident)
            ],
            out_specs=pl.BlockSpec((B, n_cls), lambda j: (0, 0)),   # acc-resident output
        ),
        compiler_params=pltpu.CompilerParams(
            dimension_semantics=("arbitrary",),  # hidden axis is Linear2's reduction
            vmem_limit_bytes=vmem_limit,
        ),
        cost_estimate=cost,
    )(x_k, w1, gb, w2, b2)


# ----------------------------- params / reference ------------------------------
def init_params(key, in_dim, hidden_dim, n_cls):
    """Mirrors the PyTorch module's parameter shapes.
    Linear weights stored pre-transposed: (in_features, out_features)."""
    k1, k2, k3, k4 = jax.random.split(key, 4)
    s1 = 1.0 / jnp.sqrt(in_dim)
    s2 = 1.0 / jnp.sqrt(hidden_dim)
    return {
        "w1": jax.random.uniform(k1, (in_dim, hidden_dim), jnp.float32, -s1, s1),
        "b1": jax.random.uniform(k2, (1, hidden_dim), jnp.float32, -s1, s1),
        "gamma": jnp.ones((1, hidden_dim), jnp.float32),   # BatchNorm1d weight
        "beta": jnp.zeros((1, hidden_dim), jnp.float32),   # BatchNorm1d bias
        "w2": jax.random.uniform(k3, (hidden_dim, n_cls), jnp.float32, -s2, s2),
        "b2": jax.random.uniform(k4, (1, n_cls), jnp.float32, -s2, s2),
    }


def reference_forward(x, p, use_bf16=False):
    """Plain-JAX reference with the PyTorch module's exact math (b1 included)."""
    md = jnp.bfloat16 if use_bf16 else jnp.float32
    h = jnp.dot(x.astype(md), p["w1"].astype(md),
                preferred_element_type=jnp.float32) + p["b1"]
    mean = jnp.mean(h, axis=0, keepdims=True)
    var = jnp.mean((h - mean) ** 2, axis=0, keepdims=True)
    h = (h - mean) * jax.lax.rsqrt(var + EPS) * p["gamma"] + p["beta"]
    h = jnp.maximum(h, 0.0)
    return jnp.dot(h.astype(md), p["w2"].astype(md),
                   preferred_element_type=jnp.float32) + p["b2"]


# ----------------------------- demo / check -------------------------------------
if __name__ == "__main__":
    # Small shapes consistent with Classifier(n_cls, in_dim, hidden_dim).
    B, in_dim, hidden_dim, n_cls = 32, 256, 1024, 16

    key = jax.random.PRNGKey(0)
    kx, kp = jax.random.split(key)
    x = jax.random.normal(kx, (B, in_dim), jnp.float32)
    params = init_params(kp, in_dim, hidden_dim, n_cls)

    # f32 path, default tiling (tile_h == hidden -> single grid step).
    prep_f32 = prepare_params(params, use_bf16=False)
    out_f32 = jax.block_until_ready(classifier_forward(x, prep_f32))
    ref_f32 = reference_forward(x, params, use_bf16=False)
    assert out_f32.shape == (B, n_cls)
    assert jnp.allclose(out_f32, ref_f32, atol=2e-3, rtol=2e-3), "f32 mismatch"

    # Multi-step hidden reduction (exercises the o_ref accumulation path).
    out_f32_t = jax.block_until_ready(classifier_forward(x, prep_f32, tile_h=256))
    assert jnp.allclose(out_f32_t, ref_f32, atol=2e-3, rtol=2e-3), "tiled f32 mismatch"

    # bf16 matmul path (v6e/v7x MXU + halved weight DMA); reference casts the same.
    prep_bf16 = prepare_params(params, use_bf16=True)
    out_bf16 = jax.block_until_ready(classifier_forward(x, prep_bf16))
    ref_bf16 = reference_forward(x, params, use_bf16=True)
    assert out_bf16.shape == (B, n_cls)
    assert jnp.allclose(out_bf16, ref_bf16, atol=3e-2, rtol=3e-2), "bf16 mismatch"

    print("KERNEL_OK")
</pallas_src>

<mosaic_0001>
module attributes {stable_mosaic.version = 11 : i64} {
  func.func @classifier_kernel(%arg0: i32, %arg1: memref<32x256xf32, #tpu.memory_space<vmem>>, %arg2: memref<256x1024xf32, #tpu.memory_space<vmem>>, %arg3: memref<2x1024xf32, #tpu.memory_space<vmem>>, %arg4: memref<1024x16xf32, #tpu.memory_space<vmem>>, %arg5: memref<1x16xf32, #tpu.memory_space<vmem>>, %arg6: memref<32x16xf32, #tpu.memory_space<vmem>>) attributes {dimension_semantics = [#tpu.dimension_semantics<arbitrary>], iteration_bounds = array<i64: 1>, scalar_prefetch = 0 : i64, scratch_operands = 0 : i64, tpu.core_type = #tpu.core_type<tc>, window_params = [{pipeline_mode = #tpu.pipeline_mode<synchronous>, transform_indices = @transform_0, window_bounds = array<i64: 32, 256>}, {transform_indices = @transform_1, window_bounds = array<i64: 256, 1024>}, {pipeline_mode = #tpu.pipeline_mode<synchronous>, transform_indices = @transform_2, window_bounds = array<i64: 2, 1024>}, {transform_indices = @transform_3, window_bounds = array<i64: 1024, 16>}, {pipeline_mode = #tpu.pipeline_mode<synchronous>, transform_indices = @transform_4, window_bounds = array<i64: 1, 16>}, {pipeline_mode = #tpu.pipeline_mode<synchronous>, transform_indices = @transform_5, window_bounds = array<i64: 32, 16>}]} {
    %c0_i32 = arith.constant 0 : i32
    %0 = arith.cmpi eq, %arg0, %c0_i32 : i32
    %1 = arith.extui %0 : i1 to i32
    %c0_i32_0 = arith.constant 0 : i32
    %2 = arith.cmpi ne, %1, %c0_i32_0 : i32
    scf.if %2 {
      %c0_19 = arith.constant 0 : index
      %c0_20 = arith.constant 0 : index
      %35 = vector.load %arg5[%c0_19, %c0_20] : memref<1x16xf32, #tpu.memory_space<vmem>>, vector<1x16xf32>
      %36 = vector.shape_cast %35 : vector<1x16xf32> to vector<1x16xf32>
      %37 = vector.broadcast %36 : vector<1x16xf32> to vector<32x16xf32>
      %c0_21 = arith.constant 0 : index
      %c0_22 = arith.constant 0 : index
      %38 = vector.load %arg6[%c0_21, %c0_22] : memref<32x16xf32, #tpu.memory_space<vmem>>, vector<32x16xf32>
      tpu.vector_store %arg6[%c0_21, %c0_22], %37 {strides = array<i32>} : memref<32x16xf32, #tpu.memory_space<vmem>>, vector<32x16xf32>,
    } else {
    }
    %c0 = arith.constant 0 : index
    %c0_1 = arith.constant 0 : index
    %3 = vector.load %arg1[%c0, %c0_1] : memref<32x256xf32, #tpu.memory_space<vmem>>, vector<32x256xf32>
    %c0_2 = arith.constant 0 : index
    %c0_3 = arith.constant 0 : index
    %4 = vector.load %arg2[%c0_2, %c0_3] : memref<256x1024xf32, #tpu.memory_space<vmem>>, vector<256x1024xf32>
    %cst = arith.constant dense<0.000000e+00> : vector<32x1024xf32>
    %5 = tpu.matmul %3, %4, %cst {dimension_numbers = #tpu.dot_dimension_numbers<[1], [0], [0], [1], [0, 0, 1, 1], [], []>} : vector<32x256xf32>, vector<256x1024xf32>, vector<32x1024xf32> -> vector<32x1024xf32>
    %c0_4 = arith.constant 0 : index
    %c0_5 = arith.constant 0 : index
    %6 = vector.load %arg3[%c0_4, %c0_5] : memref<2x1024xf32, #tpu.memory_space<vmem>>, vector<2x1024xf32>
    %7 = vector.extract_strided_slice %6 {offsets = [0, 0], sizes = [1, 1024], strides = [1, 1]} : vector<2x1024xf32> to vector<1x1024xf32>
    %8 = vector.extract_strided_slice %6 {offsets = [1, 0], sizes = [1, 1024], strides = [1, 1]} : vector<2x1024xf32> to vector<1x1024xf32>
    %cst_6 = arith.constant dense<0.000000e+00> : vector<1024xf32>
    %9 = vector.multi_reduction <add>, %5, %cst_6 [0] : vector<32x1024xf32> to vector<1024xf32>
    %10 = vector.shape_cast %9 : vector<1024xf32> to vector<1x1024xf32>
    %cst_7 = arith.constant 3.200000e+01 : f32
    %11 = vector.broadcast %cst_7 : f32 to vector<1x1024xf32>
    %12 = arith.divf %10, %11 : vector<1x1024xf32>
    %13 = vector.broadcast %12 : vector<1x1024xf32> to vector<32x1024xf32>
    %14 = arith.subf %5, %13 : vector<32x1024xf32>
    %15 = arith.mulf %14, %14 : vector<32x1024xf32>
    %cst_8 = arith.constant dense<0.000000e+00> : vector<1024xf32>
    %16 = vector.multi_reduction <add>, %15, %cst_8 [0] : vector<32x1024xf32> to vector<1024xf32>
    %17 = vector.shape_cast %16 : vector<1024xf32> to vector<1x1024xf32>
    %cst_9 = arith.constant 3.200000e+01 : f32
    %18 = vector.broadcast %cst_9 : f32 to vector<1x1024xf32>
    %19 = arith.divf %17, %18 : vector<1x1024xf32>
    %cst_10 = arith.constant 9.99999974E-6 : f32
    %20 = vector.broadcast %cst_10 : f32 to vector<1x1024xf32>
    %21 = arith.addf %19, %20 : vector<1x1024xf32>
    %22 = math.rsqrt %21 : vector<1x1024xf32>
    %23 = arith.mulf %7, %22 : vector<1x1024xf32>
    %24 = vector.broadcast %23 : vector<1x1024xf32> to vector<32x1024xf32>
    %25 = arith.mulf %14, %24 : vector<32x1024xf32>
    %26 = vector.broadcast %8 : vector<1x1024xf32> to vector<32x1024xf32>
    %27 = arith.addf %25, %26 : vector<32x1024xf32>
    %cst_11 = arith.constant 0.000000e+00 : f32
    %28 = vector.broadcast %cst_11 : f32 to vector<32x1024xf32>
    %29 = arith.maximumf %27, %28 : vector<32x1024xf32>
    %c0_12 = arith.constant 0 : index
    %c0_13 = arith.constant 0 : index
    %30 = vector.load %arg6[%c0_12, %c0_13] : memref<32x16xf32, #tpu.memory_space<vmem>>, vector<32x16xf32>
    %c0_14 = arith.constant 0 : index
    %c0_15 = arith.constant 0 : index
    %31 = vector.load %arg4[%c0_14, %c0_15] : memref<1024x16xf32, #tpu.memory_space<vmem>>, vector<1024x16xf32>
    %cst_16 = arith.constant dense<0.000000e+00> : vector<32x16xf32>
    %32 = tpu.matmul %29, %31, %cst_16 {dimension_numbers = #tpu.dot_dimension_numbers<[1], [0], [0], [1], [0, 0, 1, 1], [], []>} : vector<32x1024xf32>, vector<1024x16xf32>, vector<32x16xf32> -> vector<32x16xf32>
    %33 = arith.addf %30, %32 : vector<32x16xf32>
    %c0_17 = arith.constant 0 : index
    %c0_18 = arith.constant 0 : index
    %34 = vector.load %arg6[%c0_17, %c0_18] : memref<32x16xf32, #tpu.memory_space<vmem>>, vector<32x16xf32>
    tpu.vector_store %arg6[%c0_17, %c0_18], %33 {strides = array<i32>} : memref<32x16xf32, #tpu.memory_space<vmem>>, vector<32x16xf32>,
    return
  }
  func.func @transform_0(%arg0: i32) -> (i32, i32) {
    %c0_i32 = arith.constant 0 : i32
    %c0_i32_0 = arith.constant 0 : i32
    %c0_i32_1 = arith.constant 0 : i32
    return %c0_i32, %c0_i32_0 : i32, i32
  }
  func.func @transform_1(%arg0: i32) -> (i32, i32) {
    %c0_i32 = arith.constant 0 : i32
    %c0_i32_0 = arith.constant 0 : i32
    return %c0_i32, %arg0 : i32, i32
  }
  func.func @transform_2(%arg0: i32) -> (i32, i32) {
    %c0_i32 = arith.constant 0 : i32
    %c0_i32_0 = arith.constant 0 : i32
    %c0_i32_1 = arith.constant 0 : i32
    return %c0_i32, %c0_i32_0 : i32, i32
  }
  func.func @transform_3(%arg0: i32) -> (i32, i32) {
    %c0_i32 = arith.constant 0 : i32
    %c0_i32_0 = arith.constant 0 : i32
    return %arg0, %c0_i32 : i32, i32
  }
  func.func @transform_4(%arg0: i32) -> (i32, i32) {
    %c0_i32 = arith.constant 0 : i32
    %c0_i32_0 = arith.constant 0 : i32
    %c0_i32_1 = arith.constant 0 : i32
    return %c0_i32, %c0_i32_0 : i32, i32
  }
  func.func @transform_5(%arg0: i32) -> (i32, i32) {
    %c0_i32 = arith.constant 0 : i32
    %c0_i32_0 = arith.constant 0 : i32
    %c0_i32_1 = arith.constant 0 : i32
    return %c0_i32, %c0_i32_0 : i32, i32
  }
}

</mosaic_0001>

<llo_original>
// kernel: tpu_custom_call.1
$region0: #{tpu_custom_call.1}
  #allocation0 [shape = 'u32[]', space=smem, size = 0x4, offset = 0x4, fixed_abs, tag = 'smem constant byte address 0x4 - core index']
  #allocation1 [shape = 'u32[144,128]{1,0:T(1,128)}', space=vmem, size = 0x12000, scoped, tag = 'internal scratch']
  %s0 = inlined_call_operand.vmem [shape: f32[32,256], index: 0, kind: input, shape index: {}]
  %s1 = inlined_call_operand.hbm [shape: f32[256,1024], index: 1, kind: input, shape index: {}]
  %s2 = inlined_call_operand.vmem [shape: f32[2,1024], index: 2, kind: input, shape index: {}]
  %s3 = inlined_call_operand.vmem [shape: f32[1024,16], index: 3, kind: input, shape index: {}]
  %s4 = inlined_call_operand.vmem [shape: f32[1,16], index: 4, kind: input, shape index: {}]
  %s5 = inlined_call_operand.vmem [shape: f32[32,16], index: 5, kind: output, shape index: {}]
  %s6 = sld [smem:[#allocation0]]
  $region38: #{tpu_custom_call.1} parent=0
    _
  %s8 = ssub.s32 1, %s6
  %s9 = scalar_select 0, %s8, %s6
  $region1: #{tpu_custom_call.1} parent=0
    #allocation2 [shape = 'u8[1048576]{0}', space=vmem, size = 0x100000, scoped, tag = 'input window, operand 1, single buffered']
    #allocation3 [shape = 's32[1]{0}', space=sflag, size = 0x4, scoped, tag = 'scoped memory for tpu_custom_call.1']
    %10 = vsyncpa [#allocation3], 0
    // Predicated region
    $region2: #{tpu_custom_call.1} parent=1 // pred_check
      _
    $region3: #{tpu_custom_call.1} parent=1 // pred_check_branch
      %12 = sbr.rel (0) target = $region5
    $region4: #{tpu_custom_call.1} parent=1 // pred_region
      _
    $region5: #{tpu_custom_call.1} parent=1 // pred_fallthru
      _
    // Predicated region
    $region6: #{tpu_custom_call.1} parent=1 // pred_check
      _
    $region7: #{tpu_custom_call.1} parent=1 // pred_check_branch
      %14 = sbr.rel (0) target = $region9
    $region8: #{tpu_custom_call.1} parent=1 // pred_region
      %s16 = ssub.s32 32768, 32768
      %17 = vsyncadd [#allocation3], %s16
      %s18 = sshll.u32 [#allocation2], 4
      %s19 = int_to_ptr.vmem [resolvable:$true] %s18
      %24 = dma.hbm_to_vmem [thread:$0]  %s1, 32768, %s19, [#allocation3], 1024, 1024, 64
    $region9: #{tpu_custom_call.1} parent=1 // pred_fallthru
      _
    // Predicated region
    $region10: #{tpu_custom_call.1} parent=1 // pred_check
      _
    $region11: #{tpu_custom_call.1} parent=1 // pred_check_branch
      %26 = sbr.rel (0) target = $region13
    $region12: #{tpu_custom_call.1} parent=1 // pred_region
      _
    $region13: #{tpu_custom_call.1} parent=1 // pred_fallthru
      _
    // Predicated region
    $region14: #{tpu_custom_call.1} parent=1 // pred_check
      _
    $region15: #{tpu_custom_call.1} parent=1 // pred_check_branch
      %28 = sbr.rel (0) target = $region17
    $region16: #{tpu_custom_call.1} parent=1 // pred_region
      _
    $region17: #{tpu_custom_call.1} parent=1 // pred_fallthru
      _
    // Predicated region
    $region18: #{tpu_custom_call.1} parent=1 // pred_check
      _
    $region19: #{tpu_custom_call.1} parent=1 // pred_check_branch
      %30 = sbr.rel (0) target = $region21
    $region20: #{tpu_custom_call.1} parent=1 // pred_region
      _
    $region21: #{tpu_custom_call.1} parent=1 // pred_fallthru
      _
    // Predicated region
    $region22: #{tpu_custom_call.1} parent=1 // pred_check
      _
    $region23: #{tpu_custom_call.1} parent=1 // pred_check_branch
      %32 = sbr.rel (0) target = $region25
    $region24: #{tpu_custom_call.1} parent=1 // pred_region
      %33 = dma.done [#allocation3], 32768
    $region25: #{tpu_custom_call.1} parent=1 // pred_fallthru
      _
    %p34 = scmp.eq.s32.totalorder 0, 0
    // Predicated region
    $region26: #{tpu_custom_call.1} parent=1 // pred_check
      %p35 = pneg %p34
    $region27: #{tpu_custom_call.1} parent=1 // pred_check_branch
      %37 = sbr.rel (%p35) target = $region29
    $region28: #{tpu_custom_call.1} parent=1 // pred_region
      %v38 = vld [vmem:[%s4] sm:$0x1]
      %v40 = vlaneseq
      %v41 = vshrl.u32 %v40, 7
      %v42 = vsub.s32 0, %v41
      %v43 = vrot.slane %v38, %v42
      %vm45 = vcmask 130048
      %46 = vst.msk [vmem:[%s5] sm:$0xff] %vm45, %v43
      %47 = vst.msk [vmem:[%s5 + $0x8] sm:$0xff] %vm45, %v43
      %48 = vst.msk [vmem:[%s5 + $0x10] sm:$0xff] %vm45, %v43
      %49 = vst.msk [vmem:[%s5 + $0x18] sm:$0xff] %vm45, %v43
    $region29: #{tpu_custom_call.1} parent=1 // pred_fallthru
      _
    %v50 = vld [vmem:[%s0] sm:$0xff]
    %v51 = vld [vmem:[%s0 + $0x8] sm:$0xff]
    %v52 = vld [vmem:[%s0 + $0x10] sm:$0xff]
    %v53 = vld [vmem:[%s0 + $0x18] sm:$0xff]
    %v54 = vld [vmem:[%s0 + $0x20] sm:$0xff]
    %v55 = vld [vmem:[%s0 + $0x28] sm:$0xff]
    %v56 = vld [vmem:[%s0 + $0x30] sm:$0xff]
    %v57 = vld [vmem:[%s0 + $0x38] sm:$0xff]
    %v58 = vld [vmem:[#allocation2] sm:$0xff]
    %v59 = vld [vmem:[#allocation2 + $0x8] sm:$0xff]
    %v60 = vld [vmem:[#allocation2 + $0x10] sm:$0xff]
    %v61 = vld [vmem:[#allocation2 + $0x18] sm:$0xff]
    %v62 = vld [vmem:[#allocation2 + $0x20] sm:$0xff]
    %v63 = vld [vmem:[#allocation2 + $0x28] sm:$0xff]
    %v64 = vld [vmem:[#allocation2 + $0x30] sm:$0xff]
    %v65 = vld [vmem:[#allocation2 + $0x38] sm:$0xff]
    %v66 = vld [vmem:[#allocation2 + $0x40] sm:$0xff]
    %v67 = vld [vmem:[#allocation2 + $0x48] sm:$0xff]
    %v68 = vld [vmem:[#allocation2 + $0x50] sm:$0xff]
    %v69 = vld [vmem:[#allocation2 + $0x58] sm:$0xff]
    %v70 = vld [vmem:[#allocation2 + $0x60] sm:$0xff]
    %v71 = vld [vmem:[#allocation2 + $0x68] sm:$0xff]
    %v72 = vld [vmem:[#allocation2 + $0x70] sm:$0xff]
    %v73 = vld [vmem:[#allocation2 + $0x78] sm:$0xff]
    %v74 = vld [vmem:[#allocation2 + $0x80] sm:$0xff]
    %v75 = vld [vmem:[#allocation2 + $0x88] sm:$0xff]
    %v76 = vld [vmem:[#allocation2 + $0x90] sm:$0xff]
    %v77 = vld [vmem:[#allocation2 + $0x98] sm:$0xff]
    %v78 = vld [vmem:[#allocation2 + $0xa0] sm:$0xff]
    %v79 = vld [vmem:[#allocation2 + $0xa8] sm:$0xff]
    %v80 = vld [vmem:[#allocation2 + $0xb0] sm:$0xff]
    %v81 = vld [vmem:[#allocation2 + $0xb8] sm:$0xff]
    %v82 = vld [vmem:[#allocation2 + $0xc0] sm:$0xff]
    %v83 = vld [vmem:[#allocation2 + $0xc8] sm:$0xff]
    %v84 = vld [vmem:[#allocation2 + $0xd0] sm:$0xff]
    %v85 = vld [vmem:[#allocation2 + $0xd8] sm:$0xff]
    %v86 = vld [vmem:[#allocation2 + $0xe0] sm:$0xff]
    %v87 = vld [vmem:[#allocation2 + $0xe8] sm:$0xff]
    %v88 = vld [vmem:[#allocation2 + $0xf0] sm:$0xff]
    %v89 = vld [vmem:[#allocation2 + $0xf8] sm:$0xff]
    %v90 = vld [vmem:[#allocation2 + $0x100] sm:$0xff]
    %v91 = vld [vmem:[#allocation2 + $0x108] sm:$0xff]
    %v92 = vld [vmem:[#allocation2 + $0x110] sm:$0xff]
    %v93 = vld [vmem:[#allocation2 + $0x118] sm:$0xff]
    %v94 = vld [vmem:[#allocation2 + $0x120] sm:$0xff]
    %v95 = vld [vmem:[#allocation2 + $0x128] sm:$0xff]
    %v96 = vld [vmem:[#allocation2 + $0x130] sm:$0xff]
    %v97 = vld [vmem:[#allocation2 + $0x138] sm:$0xff]
    %v98 = vld [vmem:[#allocation2 + $0x140] sm:$0xff]
    %v99 = vld [vmem:[#allocation2 + $0x148] sm:$0xff]
    %v100 = vld [vmem:[#allocation2 + $0x150] sm:$0xff]
    %v101 = vld [vmem:[#allocation2 + $0x158] sm:$0xff]
    %v102 = vld [vmem:[#allocation2 + $0x160] sm:$0xff]
    %v103 = vld [vmem:[#allocation2 + $0x168] sm:$0xff]
    %v104 = vld [vmem:[#allocation2 + $0x170] sm:$0xff]
    %v105 = vld [vmem:[#allocation2 + $0x178] sm:$0xff]
    %v106 = vld [vmem:[#allocation2 + $0x180] sm:$0xff]
    %v107 = vld [vmem:[#allocation2 + $0x188] sm:$0xff]
    %v108 = vld [vmem:[#allocation2 + $0x190] sm:$0xff]
    %v109 = vld [vmem:[#allocation2 + $0x198] sm:$0xff]
    %v110 = vld [vmem:[#allocation2 + $0x1a0] sm:$0xff]
    %v111 = vld [vmem:[#allocation2 + $0x1a8] sm:$0xff]
    %v112 = vld [vmem:[#allocation2 + $0x1b0] sm:$0xff]
    %v113 = vld [vmem:[#allocation2 + $0x1b8] sm:$0xff]
    %v114 = vld [vmem:[#allocation2 + $0x1c0] sm:$0xff]
    %v115 = vld [vmem:[#allocation2 + $0x1c8] sm:$0xff]
    %v116 = vld [vmem:[#allocation2 + $0x1d0] sm:$0xff]
    %v117 = vld [vmem:[#allocation2 + $0x1d8] sm:$0xff]
    %v118 = vld [vmem:[#allocation2 + $0x1e0] sm:$0xff]
    %v119 = vld [vmem:[#allocation2 + $0x1e8] sm:$0xff]
    %v120 = vld [vmem:[#allocation2 + $0x1f0] sm:$0xff]
    %v121 = vld [vmem:[#allocation2 + $0x1f8] sm:$0xff]
    %v122 = vld [vmem:[#allocation2 + $0x200] sm:$0xff]
    %v123 = vld [vmem:[#allocation2 + $0x208] sm:$0xff]
    %v124 = vld [vmem:[#allocation2 + $0x210] sm:$0xff]
    %v125 = vld [vmem:[#allocation2 + $0x218] sm:$0xff]
    %v126 = vld [vmem:[#allocation2 + $0x220] sm:$0xff]
    %v127 = vld [vmem:[#allocation2 + $0x228] sm:$0xff]
    %v128 = vld [vmem:[#allocation2 + $0x230] sm:$0xff]
    %v129 = vld [vmem:[#allocation2 + $0x238] sm:$0xff]
    %v130 = vld [vmem:[#allocation2 + $0x240] sm:$0xff]
    %v131 = vld [vmem:[#allocation2 + $0x248] sm:$0xff]
    %v132 = vld [vmem:[#allocation2 + $0x250] sm:$0xff]
    %v133 = vld [vmem:[#allocation2 + $0x258] sm:$0xff]
    %v134 = vld [vmem:[#allocation2 + $0x260] sm:$0xff]
    %v135 = vld [vmem:[#allocation2 + $0x268] sm:$0xff]
    %v136 = vld [vmem:[#allocation2 + $0x270] sm:$0xff]
    %v137 = vld [vmem:[#allocation2 + $0x278] sm:$0xff]
    %v138 = vld [vmem:[#allocation2 + $0x280] sm:$0xff]
    %v139 = vld [vmem:[#allocation2 + $0x288] sm:$0xff]
    %v140 = vld [vmem:[#allocation2 + $0x290] sm:$0xff]
    %v141 = vld [vmem:[#allocation2 + $0x298] sm:$0xff]
    %v142 = vld [vmem:[#allocation2 + $0x2a0] sm:$0xff]
    %v143 = vld [vmem:[#allocation2 + $0x2a8] sm:$0xff]
    %v144 = vld [vmem:[#allocation2 + $0x2b0] sm:$0xff]
    %v145 = vld [vmem:[#allocation2 + $0x2b8] sm:$0xff]
    %v146 = vld [vmem:[#allocation2 + $0x2c0] sm:$0xff]
    %v147 = vld [vmem:[#allocation2 + $0x2c8] sm:$0xff]
    %v148 = vld [vmem:[#allocation2 + $0x2d0] sm:$0xff]
    %v149 = vld [vmem:[#allocation2 + $0x2d8] sm:$0xff]
    %v150 = vld [vmem:[#allocation2 + $0x2e0] sm:$0xff]
    %v151 = vld [vmem:[#allocation2 + $0x2e8] sm:$0xff]
    %v152 = vld [vmem:[#allocation2 + $0x2f0] sm:$0xff]
    %v153 = vld [vmem:[#allocation2 + $0x2f8] sm:$0xff]
    %v154 = vld [vmem:[#allocation2 + $0x300] sm:$0xff]
    %v155 = vld [vmem:[#allocation2 + $0x308] sm:$0xff]
    %v156 = vld [vmem:[#allocation2 + $0x310] sm:$0xff]
    %v157 = vld [vmem:[#allocation2 + $0x318] sm:$0xff]
    %v158 = vld [vmem:[#allocation2 + $0x320] sm:$0xff]
    %v159 = vld [vmem:[#allocation2 + $0x328] sm:$0xff]
    %v160 = vld [vmem:[#allocation2 + $0x330] sm:$0xff]
    %v161 = vld [vmem:[#allocation2 + $0x338] sm:$0xff]
    %v162 = vld [vmem:[#allocation2 + $0x340] sm:$0xff]
    %v163 = vld [vmem:[#allocation2 + $0x348] sm:$0xff]
    %v164 = vld [vmem:[#allocation2 + $0x350] sm:$0xff]
    %v165 = vld [vmem:[#allocation2 + $0x358] sm:$0xff]
    %v166 = vld [vmem:[#allocation2 + $0x360] sm:$0xff]
    %v167 = vld [vmem:[#allocation2 + $0x368] sm:$0xff]
    %v168 = vld [vmem:[#allocation2 + $0x370] sm:$0xff]
    %v169 = vld [vmem:[#allocation2 + $0x378] sm:$0xff]
    %v170 = vld [vmem:[#allocation2 + $0x380] sm:$0xff]
    %v171 = vld [vmem:[#allocation2 + $0x388] sm:$0xff]
    %v172 = vld [vmem:[#allocation2 + $0x390] sm:$0xff]
    %v173 = vld [vmem:[#allocation2 + $0x398] sm:$0xff]
    %v174 = vld [vmem:[#allocation2 + $0x3a0] sm:$0xff]
    %v175 = vld [vmem:[#allocation2 + $0x3a8] sm:$0xff]
    %v176 = vld [vmem:[#allocation2 + $0x3b0] sm:$0xff]
    %v177 = vld [vmem:[#allocation2 + $0x3b8] sm:$0xff]
    %v178 = vld [vmem:[#allocation2 + $0x3c0] sm:$0xff]
    %v179 = vld [vmem:[#allocation2 + $0x3c8] sm:$0xff]
    %v180 = vld [vmem:[#allocation2 + $0x3d0] sm:$0xff]
    %v181 = vld [vmem:[#allocation2 + $0x3d8] sm:$0xff]
    %v182 = vld [vmem:[#allocation2 + $0x3e0] sm:$0xff]
    %v183 = vld [vmem:[#allocation2 + $0x3e8] sm:$0xff]
    %v184 = vld [vmem:[#allocation2 + $0x3f0] sm:$0xff]
    %v185 = vld [vmem:[#allocation2 + $0x3f8] sm:$0xff]
    %v186 = vld [vmem:[#allocation2 + $0x400] sm:$0xff]
    %v187 = vld [vmem:[#allocation2 + $0x408] sm:$0xff]
    %v188 = vld [vmem:[#allocation2 + $0x410] sm:$0xff]
    %v189 = vld [vmem:[#allocation2 + $0x418] sm:$0xff]
    %v190 = vld [vmem:[#allocation2 + $0x420] sm:$0xff]
    %v191 = vld [vmem:[#allocation2 + $0x428] sm:$0xff]
    %v192 = vld [vmem:[#allocation2 + $0x430] sm:$0xff]
    %v193 = vld [vmem:[#allocation2 + $0x438] sm:$0xff]
    %v194 = vld [vmem:[#allocation2 + $0x440] sm:$0xff]
    %v195 = vld [vmem:[#allocation2 + $0x448] sm:$0xff]
    %v196 = vld [vmem:[#allocation2 + $0x450] sm:$0xff]
    %v197 = vld [vmem:[#allocation2 + $0x458] sm:$0xff]
    %v198 = vld [vmem:[#allocation2 + $0x460] sm:$0xff]
    %v199 = vld [vmem:[#allocation2 + $0x468] sm:$0xff]
    %v200 = vld [vmem:[#allocation2 + $0x470] sm:$0xff]
    %v201 = vld [vmem:[#allocation2 + $0x478] sm:$0xff]
    %v202 = vld [vmem:[#allocation2 + $0x480] sm:$0xff]
    %v203 = vld [vmem:[#allocation2 + $0x488] sm:$0xff]
    %v204 = vld [vmem:[#allocation2 + $0x490] sm:$0xff]
    %v205 = vld [vmem:[#allocation2 + $0x498] sm:$0xff]
    %v206 = vld [vmem:[#allocation2 + $0x4a0] sm:$0xff]
    %v207 = vld [vmem:[#allocation2 + $0x4a8] sm:$0xff]
    %v208 = vld [vmem:[#allocation2 + $0x4b0] sm:$0xff]
    %v209 = vld [vmem:[#allocation2 + $0x4b8] sm:$0xff]
    %v210 = vld [vmem:[#allocation2 + $0x4c0] sm:$0xff]
    %v211 = vld [vmem:[#allocation2 + $0x4c8] sm:$0xff]
    %v212 = vld [vmem:[#allocation2 + $0x4d0] sm:$0xff]
    %v213 = vld [vmem:[#allocation2 + $0x4d8] sm:$0xff]
    %v214 = vld [vmem:[#allocation2 + $0x4e0] sm:$0xff]
    %v215 = vld [vmem:[#allocation2 + $0x4e8] sm:$0xff]
    %v216 = vld [vmem:[#allocation2 + $0x4f0] sm:$0xff]
    %v217 = vld [vmem:[#allocation2 + $0x4f8] sm:$0xff]
    %v218 = vld [vmem:[#allocation2 + $0x500] sm:$0xff]
    %v219 = vld [vmem:[#allocation2 + $0x508] sm:$0xff]
    %v220 = vld [vmem:[#allocation2 + $0x510] sm:$0xff]
    %v221 = vld [vmem:[#allocation2 + $0x518] sm:$0xff]
    %v222 = vld [vmem:[#allocation2 + $0x520] sm:$0xff]
    %v223 = vld [vmem:[#allocation2 + $0x528] sm:$0xff]
    %v224 = vld [vmem:[#allocation2 + $0x530] sm:$0xff]
    %v225 = vld [vmem:[#allocation2 + $0x538] sm:$0xff]
    %v226 = vld [vmem:[#allocation2 + $0x540] sm:$0xff]
    %v227 = vld [vmem:[#allocation2 + $0x548] sm:$0xff]
    %v228 = vld [vmem:[#allocation2 + $0x550] sm:$0xff]
    %v229 = vld [vmem:[#allocation2 + $0x558] sm:$0xff]
    %v230 = vld [vmem:[#allocation2 + $0x560] sm:$0xff]
    %v231 = vld [vmem:[#allocation2 + $0x568] sm:$0xff]
    %v232 = vld [vmem:[#allocation2 + $0x570] sm:$0xff]
    %v233 = vld [vmem:[#allocation2 + $0x578] sm:$0xff]
    %v234 = vld [vmem:[#allocation2 + $0x580] sm:$0xff]
    %v235 = vld [vmem:[#allocation2 + $0x588] sm:$0xff]
    %v236 = vld [vmem:[#allocation2 + $0x590] sm:$0xff]
    %v237 = vld [vmem:[#allocation2 + $0x598] sm:$0xff]
    %v238 = vld [vmem:[#allocation2 + $0x5a0] sm:$0xff]
    %v239 = vld [vmem:[#allocation2 + $0x5a8] sm:$0xff]
    %v240 = vld [vmem:[#allocation2 + $0x5b0] sm:$0xff]
    %v241 = vld [vmem:[#allocation2 + $0x5b8] sm:$0xff]
    %v242 = vld [vmem:[#allocation2 + $0x5c0] sm:$0xff]
    %v243 = vld [vmem:[#allocation2 + $0x5c8] sm:$0xff]
    %v244 = vld [vmem:[#allocation2 + $0x5d0] sm:$0xff]
    %v245 = vld [vmem:[#allocation2 + $0x5d8] sm:$0xff]
    %v246 = vld [vmem:[#allocation2 + $0x5e0] sm:$0xff]
    %v247 = vld [vmem:[#allocation2 + $0x5e8] sm:$0xff]
    %v248 = vld [vmem:[#allocation2 + $0x5f0] sm:$0xff]
    %v249 = vld [vmem:[#allocation2 + $0x5f8] sm:$0xff]
    %v250 = vld [vmem:[#allocation2 + $0x600] sm:$0xff]
    %v251 = vld [vmem:[#allocation2 + $0x608] sm:$0xff]
    %v252 = vld [vmem:[#allocation2 + $0x610] sm:$0xff]
    %v253 = vld [vmem:[#allocation2 + $0x618] sm:$0xff]
    %v254 = vld [vmem:[#allocation2 + $0x620] sm:$0xff]
    %v255 = vld [vmem:[#allocation2 + $0x628] sm:$0xff]
    %v256 = vld [vmem:[#allocation2 + $0x630] sm:$0xff]
    %v257 = vld [vmem:[#allocation2 + $0x638] sm:$0xff]
    %v258 = vld [vmem:[#allocation2 + $0x640] sm:$0xff]
    %v259 = vld [vmem:[#allocation2 + $0x648] sm:$0xff]
    %v260 = vld [vmem:[#allocation2 + $0x650] sm:$0xff]
    %v261 = vld [vmem:[#allocation2 + $0x658] sm:$0xff]
    %v262 = vld [vmem:[#allocation2 + $0x660] sm:$0xff]
    %v263 = vld [vmem:[#allocation2 + $0x668] sm:$0xff]
    %v264 = vld [vmem:[#allocation2 + $0x670] sm:$0xff]
    %v265 = vld [vmem:[#allocation2 + $0x678] sm:$0xff]
    %v266 = vld [vmem:[#allocation2 + $0x680] sm:$0xff]
    %v267 = vld [vmem:[#allocation2 + $0x688] sm:$0xff]
    %v268 = vld [vmem:[#allocation2 + $0x690] sm:$0xff]
    %v269 = vld [vmem:[#allocation2 + $0x698] sm:$0xff]
    %v270 = vld [vmem:[#allocation2 + $0x6a0] sm:$0xff]
    %v271 = vld [vmem:[#allocation2 + $0x6a8] sm:$0xff]
    %v272 = vld [vmem:[#allocation2 + $0x6b0] sm:$0xff]
    %v273 = vld [vmem:[#allocation2 + $0x6b8] sm:$0xff]
    %v274 = vld [vmem:[#allocation2 + $0x6c0] sm:$0xff]
    %v275 = vld [vmem:[#allocation2 + $0x6c8] sm:$0xff]
    %v276 = vld [vmem:[#allocation2 + $0x6d0] sm:$0xff]
    %v277 = vld [vmem:[#allocation2 + $0x6d8] sm:$0xff]
    %v278 = vld [vmem:[#allocation2 + $0x6e0] sm:$0xff]
    %v279 = vld [vmem:[#allocation2 + $0x6e8] sm:$0xff]
    %v280 = vld [vmem:[#allocation2 + $0x6f0] sm:$0xff]
    %v281 = vld [vmem:[#allocation2 + $0x6f8] sm:$0xff]
    %v282 = vld [vmem:[#allocation2 + $0x700] sm:$0xff]
    %v283 = vld [vmem:[#allocation2 + $0x708] sm:$0xff]
    %v284 = vld [vmem:[#allocation2 + $0x710] sm:$0xff]
    %v285 = vld [vmem:[#allocation2 + $0x718] sm:$0xff]
    %v286 = vld [vmem:[#allocation2 + $0x720] sm:$0xff]
    %v287 = vld [vmem:[#allocation2 + $0x728] sm:$0xff]
    %v288 = vld [vmem:[#allocation2 + $0x730] sm:$0xff]
    %v289 = vld [vmem:[#allocation2 + $0x738] sm:$0xff]
    %v290 = vld [vmem:[#allocation2 + $0x740] sm:$0xff]
    %v291 = vld [vmem:[#allocation2 + $0x748] sm:$0xff]
    %v292 = vld [vmem:[#allocation2 + $0x750] sm:$0xff]
    %v293 = vld [vmem:[#allocation2 + $0x758] sm:$0xff]
    %v294 = vld [vmem:[#allocation2 + $0x760] sm:$0xff]
    %v295 = vld [vmem:[#allocation2 + $0x768] sm:$0xff]
    %v296 = vld [vmem:[#allocation2 + $0x770] sm:$0xff]
    %v297 = vld [vmem:[#allocation2 + $0x778] sm:$0xff]
    %v298 = vld [vmem:[#allocation2 + $0x780] sm:$0xff]
    %v299 = vld [vmem:[#allocation2 + $0x788] sm:$0xff]
    %v300 = vld [vmem:[#allocation2 + $0x790] sm:$0xff]
    %v301 = vld [vmem:[#allocation2 + $0x798] sm:$0xff]
    %v302 = vld [vmem:[#allocation2 + $0x7a0] sm:$0xff]
    %v303 = vld [vmem:[#allocation2 + $0x7a8] sm:$0xff]
    %v304 = vld [vmem:[#allocation2 + $0x7b0] sm:$0xff]
    %v305 = vld [vmem:[#allocation2 + $0x7b8] sm:$0xff]
    %v306 = vld [vmem:[#allocation2 + $0x7c0] sm:$0xff]
    %v307 = vld [vmem:[#allocation2 + $0x7c8] sm:$0xff]
    %v308 = vld [vmem:[#allocation2 + $0x7d0] sm:$0xff]
    %v309 = vld [vmem:[#allocation2 + $0x7d8] sm:$0xff]
    %v310 = vld [vmem:[#allocation2 + $0x7e0] sm:$0xff]
    %v311 = vld [vmem:[#allocation2 + $0x7e8] sm:$0xff]
    %v312 = vld [vmem:[#allocation2 + $0x7f0] sm:$0xff]
    %v313 = vld [vmem:[#allocation2 + $0x7f8] sm:$0xff]
    %314 = vmatprep.subr.mxu0 %v179
    %315 = vmatpush1.msra.mxu0 %v178
    %316 = vmatprep.subr.mxu0 %v171
    %317 = vmatpush1.msra.mxu0 %v170
    %318 = vmatprep.subr.mxu0 %v163
    %319 = vmatpush1.msra.mxu0 %v162
    %320 = vmatprep.subr.mxu0 %v155
    %321 = vmatpush1.msra.mxu0 %v154
    %322 = vmatprep.subr.mxu0 %v147
    %323 = vmatpush1.msra.mxu0 %v146
    %324 = vmatprep.subr.mxu0 %v139
    %325 = vmatpush1.msra.mxu0 %v138
    %326 = vmatprep.subr.mxu0 %v131
    %327 = vmatpush1.msra.mxu0 %v130
    %328 = vmatprep.subr.mxu0 %v123
    %329 = vmatpush1.msra.mxu0 %v122
    %330 = vmatprep.subr.mxu0 %v115
    %331 = vmatpush1.msra.mxu0 %v114
    %332 = vmatprep.subr.mxu0 %v107
    %333 = vmatpush1.msra.mxu0 %v106
    %334 = vmatprep.subr.mxu0 %v99
    %335 = vmatpush1.msra.mxu0 %v98
    %336 = vmatprep.subr.mxu0 %v91
    %337 = vmatpush1.msra.mxu0 %v90
    %338 = vmatprep.subr.mxu0 %v83
    %339 = vmatpush1.msra.mxu0 %v82
    %340 = vmatprep.subr.mxu0 %v75
    %341 = vmatpush1.msra.mxu0 %v74
    %342 = vmatprep.subr.mxu0 %v67
    %343 = vmatpush1.msra.mxu0 %v66
    %344 = vmatprep.subr.mxu0 %v59
    %345 = vmatpush1.msra.mxu0 %v58
    %346 = vmatprep.subr.mxu0 %v307
    %347 = vmatpush2.msra.mxu0 %v306
    %348 = vmatprep.subr.mxu0 %v299
    %349 = vmatpush2.msra.mxu0 %v298
    %350 = vmatprep.subr.mxu0 %v291
    %351 = vmatpush2.msra.mxu0 %v290
    %352 = vmatprep.subr.mxu0 %v283
    %353 = vmatpush2.msra.mxu0 %v282
    %354 = vmatprep.subr.mxu0 %v275
    %355 = vmatpush2.msra.mxu0 %v274
    %356 = vmatprep.subr.mxu0 %v267
    %357 = vmatpush2.msra.mxu0 %v266
    %358 = vmatprep.subr.mxu0 %v259
    %359 = vmatpush2.msra.mxu0 %v258
    %360 = vmatprep.subr.mxu0 %v251
    %361 = vmatpush2.msra.mxu0 %v250
    %362 = vmatprep.subr.mxu0 %v243
    %363 = vmatpush2.msra.mxu0 %v242
    %364 = vmatprep.subr.mxu0 %v235
    %365 = vmatpush2.msra.mxu0 %v234
    %366 = vmatprep.subr.mxu0 %v227
    %367 = vmatpush2.msra.mxu0 %v226
    %368 = vmatprep.subr.mxu0 %v219
    %369 = vmatpush2.msra.mxu0 %v218
    %370 = vmatprep.subr.mxu0 %v211
    %371 = vmatpush2.msra.mxu0 %v210
    %372 = vmatprep.subr.mxu0 %v203
    %373 = vmatpush2.msra.mxu0 %v202
    %374 = vmatprep.subr.mxu0 %v195
    %375 = vmatpush2.msra.mxu0 %v194
    %376 = vmatprep.subr.mxu0 %v187
    %377 = vmatpush2.msra.mxu0 %v186
    %378 = vmatprep.mubr.f32.mxu0 %v51
    %379 = vmatmul.mubr.f32.gmra.mxu0 %v50
    %v380 = vpop.f32.mrf.mxu0
    %v381 = vadd.f32 0.0, %v380
    %v382 = vpop.f32.mrf.mxu0
    %v383 = vadd.f32 0.0, %v382
    %384 = vmatprep.mubr.f32.mxu0 %v53
    %385 = vmatmul.mubr.f32.gmra.mxu0 %v52
    %v386 = vpop.f32.mrf.mxu0
    %v387 = vadd.f32 0.0, %v386
    %v388 = vpop.f32.mrf.mxu0
    %v389 = vadd.f32 0.0, %v388
    %390 = vmatprep.mubr.f32.mxu0 %v55
    %391 = vmatmul.mubr.f32.gmra.mxu0 %v54
    %v392 = vpop.f32.mrf.mxu0
    %v393 = vadd.f32 0.0, %v392
    %v394 = vpop.f32.mrf.mxu0
    %v395 = vadd.f32 0.0, %v394
    %396 = vmatprep.mubr.f32.mxu0 %v57
    %397 = vmatmul.mubr.f32.gmra.mxu0 %v56
    %v398 = vpop.f32.mrf.mxu0
    %v399 = vadd.f32 0.0, %v398
    %v400 = vpop.f32.mrf.mxu0
    %v401 = vadd.f32 0.0, %v400
    %402 = vdwg.mxu0
    %403 = vmatprep.subr.mxu0 %v181
    %404 = vmatpush1.msra.mxu0 %v180
    %405 = vmatprep.subr.mxu0 %v173
    %406 = vmatpush1.msra.mxu0 %v172
    %407 = vmatprep.subr.mxu0 %v165
    %408 = vmatpush1.msra.mxu0 %v164
    %409 = vmatprep.subr.mxu0 %v157
    %410 = vmatpush1.msra.mxu0 %v156
    %411 = vmatprep.subr.mxu0 %v149
    %412 = vmatpush1.msra.mxu0 %v148
    %413 = vmatprep.subr.mxu0 %v141
    %414 = vmatpush1.msra.mxu0 %v140
    %415 = vmatprep.subr.mxu0 %v133
    %416 = vmatpush1.msra.mxu0 %v132
    %417 = vmatprep.subr.mxu0 %v125
    %418 = vmatpush1.msra.mxu0 %v124
    %419 = vmatprep.subr.mxu0 %v117
    %420 = vmatpush1.msra.mxu0 %v116
    %421 = vmatprep.subr.mxu0 %v109
    %422 = vmatpush1.msra.mxu0 %v108
    %423 = vmatprep.subr.mxu0 %v101
    %424 = vmatpush1.msra.mxu0 %v100
    %425 = vmatprep.subr.mxu0 %v93
    %426 = vmatpush1.msra.mxu0 %v92
    %427 = vmatprep.subr.mxu0 %v85
    %428 = vmatpush1.msra.mxu0 %v84
    %429 = vmatprep.subr.mxu0 %v77
    %430 = vmatpush1.msra.mxu0 %v76
    %431 = vmatprep.subr.mxu0 %v69
    %432 = vmatpush1.msra.mxu0 %v68
    %433 = vmatprep.subr.mxu0 %v61
    %434 = vmatpush1.msra.mxu0 %v60
    %435 = vmatprep.subr.mxu0 %v309
    %436 = vmatpush2.msra.mxu0 %v308
    %437 = vmatprep.subr.mxu0 %v301
    %438 = vmatpush2.msra.mxu0 %v300
    %439 = vmatprep.subr.mxu0 %v293
    %440 = vmatpush2.msra.mxu0 %v292
    %441 = vmatprep.subr.mxu0 %v285
    %442 = vmatpush2.msra.mxu0 %v284
    %443 = vmatprep.subr.mxu0 %v277
    %444 = vmatpush2.msra.mxu0 %v276
    %445 = vmatprep.subr.mxu0 %v269
    %446 = vmatpush2.msra.mxu0 %v268
    %447 = vmatprep.subr.mxu0 %v261
    %448 = vmatpush2.msra.mxu0 %v260
    %449 = vmatprep.subr.mxu0 %v253
    %450 = vmatpush2.msra.mxu0 %v252
    %451 = vmatprep.subr.mxu0 %v245
    %452 = vmatpush2.msra.mxu0 %v244
    %453 = vmatprep.subr.mxu0 %v237
    %454 = vmatpush2.msra.mxu0 %v236
    %455 = vmatprep.subr.mxu0 %v229
    %456 = vmatpush2.msra.mxu0 %v228
    %457 = vmatprep.subr.mxu0 %v221
    %458 = vmatpush2.msra.mxu0 %v220
    %459 = vmatprep.subr.mxu0 %v213
    %460 = vmatpush2.msra.mxu0 %v212
    %461 = vmatprep.subr.mxu0 %v205
    %462 = vmatpush2.msra.mxu0 %v204
    %463 = vmatprep.subr.mxu0 %v197
    %464 = vmatpush2.msra.mxu0 %v196
    %465 = vmatprep.subr.mxu0 %v189
    %466 = vmatpush2.msra.mxu0 %v188
    %467 = vmatprep.mubr.f32.mxu0 %v51
    %468 = vmatmul.mubr.f32.gmra.mxu0 %v50
    %v469 = vpop.f32.mrf.mxu0
    %v470 = vadd.f32 0.0, %v469
    %v471 = vpop.f32.mrf.mxu0
    %v472 = vadd.f32 0.0, %v471
    %473 = vmatprep.mubr.f32.mxu0 %v53
    %474 = vmatmul.mubr.f32.gmra.mxu0 %v52
    %v475 = vpop.f32.mrf.mxu0
    %v476 = vadd.f32 0.0, %v475
    %v477 = vpop.f32.mrf.mxu0
    %v478 = vadd.f32 0.0, %v477
    %479 = vmatprep.mubr.f32.mxu0 %v55
    %480 = vmatmul.mubr.f32.gmra.mxu0 %v54
    %v481 = vpop.f32.mrf.mxu0
    %v482 = vadd.f32 0.0, %v481
    %v483 = vpop.f32.mrf.mxu0
    %v484 = vadd.f32 0.0, %v483
    %485 = vmatprep.mubr.f32.mxu0 %v57
    %486 = vmatmul.mubr.f32.gmra.mxu0 %v56
    %v487 = vpop.f32.mrf.mxu0
    %v488 = vadd.f32 0.0, %v487
    %v489 = vpop.f32.mrf.mxu0
    %v490 = vadd.f32 0.0, %v489
    %491 = vdwg.mxu0
    %492 = vmatprep.subr.mxu0 %v183
    %493 = vmatpush1.msra.mxu0 %v182
    %494 = vmatprep.subr.mxu0 %v175
    %495 = vmatpush1.msra.mxu0 %v174
    %496 = vmatprep.subr.mxu0 %v167
    %497 = vmatpush1.msra.mxu0 %v166
    %498 = vmatprep.subr.mxu0 %v159
    %499 = vmatpush1.msra.mxu0 %v158
    %500 = vmatprep.subr.mxu0 %v151
    %501 = vmatpush1.msra.mxu0 %v150
    %502 = vmatprep.subr.mxu0 %v143
    %503 = vmatpush1.msra.mxu0 %v142
    %504 = vmatprep.subr.mxu0 %v135
    %505 = vmatpush1.msra.mxu0 %v134
    %506 = vmatprep.subr.mxu0 %v127
    %507 = vmatpush1.msra.mxu0 %v126
    %508 = vmatprep.subr.mxu0 %v119
    %509 = vmatpush1.msra.mxu0 %v118
    %510 = vmatprep.subr.mxu0 %v111
    %511 = vmatpush1.msra.mxu0 %v110
    %512 = vmatprep.subr.mxu0 %v103
    %513 = vmatpush1.msra.mxu0 %v102
    %514 = vmatprep.subr.mxu0 %v95
    %515 = vmatpush1.msra.mxu0 %v94
    %516 = vmatprep.subr.mxu0 %v87
    %517 = vmatpush1.msra.mxu0 %v86
    %518 = vmatprep.subr.mxu0 %v79
    %519 = vmatpush1.msra.mxu0 %v78
    %520 = vmatprep.subr.mxu0 %v71
    %521 = vmatpush1.msra.mxu0 %v70
    %522 = vmatprep.subr.mxu0 %v63
    %523 = vmatpush1.msra.mxu0 %v62
    %524 = vmatprep.subr.mxu0 %v311
    %525 = vmatpush2.msra.mxu0 %v310
    %526 = vmatprep.subr.mxu0 %v303
    %527 = vmatpush2.msra.mxu0 %v302
    %528 = vmatprep.subr.mxu0 %v295
    %529 = vmatpush2.msra.mxu0 %v294
    %530 = vmatprep.subr.mxu0 %v287
    %531 = vmatpush2.msra.mxu0 %v286
    %532 = vmatprep.subr.mxu0 %v279
    %533 = vmatpush2.msra.mxu0 %v278
    %534 = vmatprep.subr.mxu0 %v271
    %535 = vmatpush2.msra.mxu0 %v270
    %536 = vmatprep.subr.mxu0 %v263
    %537 = vmatpush2.msra.mxu0 %v262
    %538 = vmatprep.subr.mxu0 %v255
    %539 = vmatpush2.msra.mxu0 %v254
    %540 = vmatprep.subr.mxu0 %v247
    %541 = vmatpush2.msra.mxu0 %v246
    %542 = vmatprep.subr.mxu0 %v239
    %543 = vmatpush2.msra.mxu0 %v238
    %544 = vmatprep.subr.mxu0 %v231
    %545 = vmatpush2.msra.mxu0 %v230
    %546 = vmatprep.subr.mxu0 %v223
    %547 = vmatpush2.msra.mxu0 %v222
    %548 = vmatprep.subr.mxu0 %v215
    %549 = vmatpush2.msra.mxu0 %v214
    %550 = vmatprep.subr.mxu0 %v207
    %551 = vmatpush2.msra.mxu0 %v206
    %552 = vmatprep.subr.mxu0 %v199
    %553 = vmatpush2.msra.mxu0 %v198
    %554 = vmatprep.subr.mxu0 %v191
    %555 = vmatpush2.msra.mxu0 %v190
    %556 = vmatprep.mubr.f32.mxu0 %v51
    %557 = vmatmul.mubr.f32.gmra.mxu0 %v50
    %v558 = vpop.f32.mrf.mxu0
    %v559 = vadd.f32 0.0, %v558
    %v560 = vpop.f32.mrf.mxu0
    %v561 = vadd.f32 0.0, %v560
    %562 = vmatprep.mubr.f32.mxu0 %v53
    %563 = vmatmul.mubr.f32.gmra.mxu0 %v52
    %v564 = vpop.f32.mrf.mxu0
    %v565 = vadd.f32 0.0, %v564
    %v566 = vpop.f32.mrf.mxu0
    %v567 = vadd.f32 0.0, %v566
    %568 = vmatprep.mubr.f32.mxu0 %v55
    %569 = vmatmul.mubr.f32.gmra.mxu0 %v54
    %v570 = vpop.f32.mrf.mxu0
    %v571 = vadd.f32 0.0, %v570
    %v572 = vpop.f32.mrf.mxu0
    %v573 = vadd.f32 0.0, %v572
    %574 = vmatprep.mubr.f32.mxu0 %v57
    %575 = vmatmul.mubr.f32.gmra.mxu0 %v56
    %v576 = vpop.f32.mrf.mxu0
    %v577 = vadd.f32 0.0, %v576
    %v578 = vpop.f32.mrf.mxu0
    %v579 = vadd.f32 0.0, %v578
    %580 = vdwg.mxu0
    %581 = vmatprep.subr.mxu0 %v185
    %582 = vmatpush1.msra.mxu0 %v184
    %583 = vmatprep.subr.mxu0 %v177
    %584 = vmatpush1.msra.mxu0 %v176
    %585 = vmatprep.subr.mxu0 %v169
    %586 = vmatpush1.msra.mxu0 %v168
    %587 = vmatprep.subr.mxu0 %v161
    %588 = vmatpush1.msra.mxu0 %v160
    %589 = vmatprep.subr.mxu0 %v153
    %590 = vmatpush1.msra.mxu0 %v152
    %591 = vmatprep.subr.mxu0 %v145
    %592 = vmatpush1.msra.mxu0 %v144
    %593 = vmatprep.subr.mxu0 %v137
    %594 = vmatpush1.msra.mxu0 %v136
    %595 = vmatprep.subr.mxu0 %v129
    %596 = vmatpush1.msra.mxu0 %v128
    %597 = vmatprep.subr.mxu0 %v121
    %598 = vmatpush1.msra.mxu0 %v120
    %599 = vmatprep.subr.mxu0 %v113
    %600 = vmatpush1.msra.mxu0 %v112
    %601 = vmatprep.subr.mxu0 %v105
    %602 = vmatpush1.msra.mxu0 %v104
    %603 = vmatprep.subr.mxu0 %v97
    %604 = vmatpush1.msra.mxu0 %v96
    %605 = vmatprep.subr.mxu0 %v89
    %606 = vmatpush1.msra.mxu0 %v88
    %607 = vmatprep.subr.mxu0 %v81
    %608 = vmatpush1.msra.mxu0 %v80
    %609 = vmatprep.subr.mxu0 %v73
    %610 = vmatpush1.msra.mxu0 %v72
    %611 = vmatprep.subr.mxu0 %v65
    %612 = vmatpush1.msra.mxu0 %v64
    %613 = vmatprep.subr.mxu0 %v313
    %614 = vmatpush2.msra.mxu0 %v312
    %615 = vmatprep.subr.mxu0 %v305
    %616 = vmatpush2.msra.mxu0 %v304
    %617 = vmatprep.subr.mxu0 %v297
    %618 = vmatpush2.msra.mxu0 %v296
    %619 = vmatprep.subr.mxu0 %v289
    %620 = vmatpush2.msra.mxu0 %v288
    %621 = vmatprep.subr.mxu0 %v281
    %622 = vmatpush2.msra.mxu0 %v280
    %623 = vmatprep.subr.mxu0 %v273
    %624 = vmatpush2.msra.mxu0 %v272
    %625 = vmatprep.subr.mxu0 %v265
    %626 = vmatpush2.msra.mxu0 %v264
    %627 = vmatprep.subr.mxu0 %v257
    %628 = vmatpush2.msra.mxu0 %v256
    %629 = vmatprep.subr.mxu0 %v249
    %630 = vmatpush2.msra.mxu0 %v248
    %631 = vmatprep.subr.mxu0 %v241
    %632 = vmatpush2.msra.mxu0 %v240
    %633 = vmatprep.subr.mxu0 %v233
    %634 = vmatpush2.msra.mxu0 %v232
    %635 = vmatprep.subr.mxu0 %v225
    %636 = vmatpush2.msra.mxu0 %v224
    %637 = vmatprep.subr.mxu0 %v217
    %638 = vmatpush2.msra.mxu0 %v216
    %639 = vmatprep.subr.mxu0 %v209
    %640 = vmatpush2.msra.mxu0 %v208
    %641 = vmatprep.subr.mxu0 %v201
    %642 = vmatpush2.msra.mxu0 %v200
    %643 = vmatprep.subr.mxu0 %v193
    %644 = vmatpush2.msra.mxu0 %v192
    %645 = vmatprep.mubr.f32.mxu0 %v51
    %646 = vmatmul.mubr.f32.gmra.mxu0 %v50
    %v647 = vpop.f32.mrf.mxu0
    %v648 = vadd.f32 0.0, %v647
    %v649 = vpop.f32.mrf.mxu0
    %v650 = vadd.f32 0.0, %v649
    %651 = vmatprep.mubr.f32.mxu0 %v53
    %652 = vmatmul.mubr.f32.gmra.mxu0 %v52
    %v653 = vpop.f32.mrf.mxu0
    %v654 = vadd.f32 0.0, %v653
    %v655 = vpop.f32.mrf.mxu0
    %v656 = vadd.f32 0.0, %v655
    %657 = vmatprep.mubr.f32.mxu0 %v55
    %658 = vmatmul.mubr.f32.gmra.mxu0 %v54
    %v659 = vpop.f32.mrf.mxu0
    %v660 = vadd.f32 0.0, %v659
    %v661 = vpop.f32.mrf.mxu0
    %v662 = vadd.f32 0.0, %v661
    %663 = vmatprep.mubr.f32.mxu0 %v57
    %664 = vmatmul.mubr.f32.gmra.mxu0 %v56
    %v665 = vpop.f32.mrf.mxu0
    %v666 = vadd.f32 0.0, %v665
    %v667 = vpop.f32.mrf.mxu0
    %v668 = vadd.f32 0.0, %v667
    %669 = vdwg.mxu0
    %v670 = vld [vmem:[%s2] sm:$0xff]
    %v671 = vld [vmem:[%s2 + $0x8] sm:$0xff]
    %v672 = vadd.f32 %v381, %v387
    %v673 = vadd.f32 %v672, %v393
    %v674 = vadd.f32 %v673, %v399
    %v675 = vrot.slane %v674, 4
    %v676 = vadd.f32 %v674, %v675
    %v677 = vrot.slane %v676, 2
    %v678 = vadd.f32 %v676, %v677
    %v679 = vrot.slane %v678, 1
    %v680 = vadd.f32 %v678, %v679
    %v681 = vadd.f32 %v383, %v389
    %v682 = vadd.f32 %v681, %v395
    %v683 = vadd.f32 %v682, %v401
    %v684 = vrot.slane %v683, 4
    %v685 = vadd.f32 %v683, %v684
    %v686 = vrot.slane %v685, 2
    %v687 = vadd.f32 %v685, %v686
    %v688 = vrot.slane %v687, 1
    %v689 = vadd.f32 %v687, %v688
    %v690 = vadd.f32 %v470, %v476
    %v691 = vadd.f32 %v690, %v482
    %v692 = vadd.f32 %v691, %v488
    %v693 = vrot.slane %v692, 4
    %v694 = vadd.f32 %v692, %v693
    %v695 = vrot.slane %v694, 2
    %v696 = vadd.f32 %v694, %v695
    %v697 = vrot.slane %v696, 1
    %v698 = vadd.f32 %v696, %v697
    %v699 = vadd.f32 %v472, %v478
    %v700 = vadd.f32 %v699, %v484
    %v701 = vadd.f32 %v700, %v490
    %v702 = vrot.slane %v701, 4
    %v703 = vadd.f32 %v701, %v702
    %v704 = vrot.slane %v703, 2
    %v705 = vadd.f32 %v703, %v704
    %v706 = vrot.slane %v705, 1
    %v707 = vadd.f32 %v705, %v706
    %v708 = vadd.f32 %v559, %v565
    %v709 = vadd.f32 %v708, %v571
    %v710 = vadd.f32 %v709, %v577
    %v711 = vrot.slane %v710, 4
    %v712 = vadd.f32 %v710, %v711
    %v713 = vrot.slane %v712, 2
    %v714 = vadd.f32 %v712, %v713
    %v715 = vrot.slane %v714, 1
    %v716 = vadd.f32 %v714, %v715
    %v717 = vadd.f32 %v561, %v567
    %v718 = vadd.f32 %v717, %v573
    %v719 = vadd.f32 %v718, %v579
    %v720 = vrot.slane %v719, 4
    %v721 = vadd.f32 %v719, %v720
    %v722 = vrot.slane %v721, 2
    %v723 = vadd.f32 %v721, %v722
    %v724 = vrot.slane %v723, 1
    %v725 = vadd.f32 %v723, %v724
    %v726 = vadd.f32 %v648, %v654
    %v727 = vadd.f32 %v726, %v660
    %v728 = vadd.f32 %v727, %v666
    %v729 = vrot.slane %v728, 4
    %v730 = vadd.f32 %v728, %v729
    %v731 = vrot.slane %v730, 2
    %v732 = vadd.f32 %v730, %v731
    %v733 = vrot.slane %v732, 1
    %v734 = vadd.f32 %v732, %v733
    %v735 = vadd.f32 %v650, %v656
    %v736 = vadd.f32 %v735, %v662
    %v737 = vadd.f32 %v736, %v668
    %v738 = vrot.slane %v737, 4
    %v739 = vadd.f32 %v737, %v738
    %v740 = vrot.slane %v739, 2
    %v741 = vadd.f32 %v739, %v740
    %v742 = vrot.slane %v741, 1
    %v743 = vadd.f32 %v741, %v742
    %v744 = vrcp.pop 32.0
    %v745 = vmul.f32 %v680, %v744
    %v746 = vmul.f32 %v689, %v744
    %v747 = vmul.f32 %v698, %v744
    %v748 = vmul.f32 %v707, %v744
    %v749 = vmul.f32 %v716, %v744
    %v750 = vmul.f32 %v725, %v744
    %v751 = vmul.f32 %v734, %v744
    %v752 = vmul.f32 %v743, %v744
    %v753 = vsub.f32 %v381, %v745
    %v754 = vsub.f32 %v383, %v746
    %v755 = vsub.f32 %v470, %v747
    %v756 = vsub.f32 %v472, %v748
    %v757 = vsub.f32 %v559, %v749
    %v758 = vsub.f32 %v561, %v750
    %v759 = vsub.f32 %v648, %v751
    %v760 = vsub.f32 %v650, %v752
    %v761 = vsub.f32 %v387, %v745
    %v762 = vsub.f32 %v389, %v746
    %v763 = vsub.f32 %v476, %v747
    %v764 = vsub.f32 %v478, %v748
    %v765 = vsub.f32 %v565, %v749
    %v766 = vsub.f32 %v567, %v750
    %v767 = vsub.f32 %v654, %v751
    %v768 = vsub.f32 %v656, %v752
    %v769 = vsub.f32 %v393, %v745
    %v770 = vsub.f32 %v395, %v746
    %v771 = vsub.f32 %v482, %v747
    %v772 = vsub.f32 %v484, %v748
    %v773 = vsub.f32 %v571, %v749
    %v774 = vsub.f32 %v573, %v750
    %v775 = vsub.f32 %v660, %v751
    %v776 = vsub.f32 %v662, %v752
    %v777 = vsub.f32 %v399, %v745
    %v778 = vsub.f32 %v401, %v746
    %v779 = vsub.f32 %v488, %v747
    %v780 = vsub.f32 %v490, %v748
    %v781 = vsub.f32 %v577, %v749
    %v782 = vsub.f32 %v579, %v750
    %v783 = vsub.f32 %v666, %v751
    %v784 = vsub.f32 %v668, %v752
    %v785 = vmul.f32 %v753, %v753
    %v786 = vmul.f32 %v754, %v754
    %v787 = vmul.f32 %v755, %v755
    %v788 = vmul.f32 %v756, %v756
    %v789 = vmul.f32 %v757, %v757
    %v790 = vmul.f32 %v758, %v758
    %v791 = vmul.f32 %v759, %v759
    %v792 = vmul.f32 %v760, %v760
    %v793 = vmul.f32 %v761, %v761
    %v794 = vmul.f32 %v762, %v762
    %v795 = vmul.f32 %v763, %v763
    %v796 = vmul.f32 %v764, %v764
    %v797 = vmul.f32 %v765, %v765
    %v798 = vmul.f32 %v766, %v766
    %v799 = vmul.f32 %v767, %v767
    %v800 = vmul.f32 %v768, %v768
    %v801 = vmul.f32 %v769, %v769
    %v802 = vmul.f32 %v770, %v770
    %v803 = vmul.f32 %v771, %v771
    %v804 = vmul.f32 %v772, %v772
    %v805 = vmul.f32 %v773, %v773
    %v806 = vmul.f32 %v774, %v774
    %v807 = vmul.f32 %v775, %v775
    %v808 = vmul.f32 %v776, %v776
    %v809 = vmul.f32 %v777, %v777
    %v810 = vmul.f32 %v778, %v778
    %v811 = vmul.f32 %v779, %v779
    %v812 = vmul.f32 %v780, %v780
    %v813 = vmul.f32 %v781, %v781
    %v814 = vmul.f32 %v782, %v782
    %v815 = vmul.f32 %v783, %v783
    %v816 = vmul.f32 %v784, %v784
    %v817 = vadd.f32 %v785, %v793
    %v818 = vadd.f32 %v817, %v801
    %v819 = vadd.f32 %v818, %v809
    %v820 = vrot.slane %v819, 4
    %v821 = vadd.f32 %v819, %v820
    %v822 = vrot.slane %v821, 2
    %v823 = vadd.f32 %v821, %v822
    %v824 = vrot.slane %v823, 1
    %v825 = vadd.f32 %v823, %v824
    %v826 = vadd.f32 %v786, %v794
    %v827 = vadd.f32 %v826, %v802
    %v828 = vadd.f32 %v827, %v810
    %v829 = vrot.slane %v828, 4
    %v830 = vadd.f32 %v828, %v829
    %v831 = vrot.slane %v830, 2
    %v832 = vadd.f32 %v830, %v831
    %v833 = vrot.slane %v832, 1
    %v834 = vadd.f32 %v832, %v833
    %v835 = vadd.f32 %v787, %v795
    %v836 = vadd.f32 %v835, %v803
    %v837 = vadd.f32 %v836, %v811
    %v838 = vrot.slane %v837, 4
    %v839 = vadd.f32 %v837, %v838
    %v840 = vrot.slane %v839, 2
    %v841 = vadd.f32 %v839, %v840
    %v842 = vrot.slane %v841, 1
    %v843 = vadd.f32 %v841, %v842
    %v844 = vadd.f32 %v788, %v796
    %v845 = vadd.f32 %v844, %v804
    %v846 = vadd.f32 %v845, %v812
    %v847 = vrot.slane %v846, 4
    %v848 = vadd.f32 %v846, %v847
    %v849 = vrot.slane %v848, 2
    %v850 = vadd.f32 %v848, %v849
    %v851 = vrot.slane %v850, 1
    %v852 = vadd.f32 %v850, %v851
    %v853 = vadd.f32 %v789, %v797
    %v854 = vadd.f32 %v853, %v805
    %v855 = vadd.f32 %v854, %v813
    %v856 = vrot.slane %v855, 4
    %v857 = vadd.f32 %v855, %v856
    %v858 = vrot.slane %v857, 2
    %v859 = vadd.f32 %v857, %v858
    %v860 = vrot.slane %v859, 1
    %v861 = vadd.f32 %v859, %v860
    %v862 = vadd.f32 %v790, %v798
    %v863 = vadd.f32 %v862, %v806
    %v864 = vadd.f32 %v863, %v814
    %v865 = vrot.slane %v864, 4
    %v866 = vadd.f32 %v864, %v865
    %v867 = vrot.slane %v866, 2
    %v868 = vadd.f32 %v866, %v867
    %v869 = vrot.slane %v868, 1
    %v870 = vadd.f32 %v868, %v869
    %v871 = vadd.f32 %v791, %v799
    %v872 = vadd.f32 %v871, %v807
    %v873 = vadd.f32 %v872, %v815
    %v874 = vrot.slane %v873, 4
    %v875 = vadd.f32 %v873, %v874
    %v876 = vrot.slane %v875, 2
    %v877 = vadd.f32 %v875, %v876
    %v878 = vrot.slane %v877, 1
    %v879 = vadd.f32 %v877, %v878
    %v880 = vadd.f32 %v792, %v800
    %v881 = vadd.f32 %v880, %v808
    %v882 = vadd.f32 %v881, %v816
    %v883 = vrot.slane %v882, 4
    %v884 = vadd.f32 %v882, %v883
    %v885 = vrot.slane %v884, 2
    %v886 = vadd.f32 %v884, %v885
    %v887 = vrot.slane %v886, 1
    %v888 = vadd.f32 %v886, %v887
    %v889 = vmul.f32 %v825, %v744
    %v890 = vmul.f32 %v834, %v744
    %v891 = vmul.f32 %v843, %v744
    %v892 = vmul.f32 %v852, %v744
    %v893 = vmul.f32 %v861, %v744
    %v894 = vmul.f32 %v870, %v744
    %v895 = vmul.f32 %v879, %v744
    %v896 = vmul.f32 %v888, %v744
    %v897 = vadd.f32 %v889, 1e-05
    %v898 = vadd.f32 %v890, 1e-05
    %v899 = vadd.f32 %v891, 1e-05
    %v900 = vadd.f32 %v892, 1e-05
    %v901 = vadd.f32 %v893, 1e-05
    %v902 = vadd.f32 %v894, 1e-05
    %v903 = vadd.f32 %v895, 1e-05
    %v904 = vadd.f32 %v896, 1e-05
    %v905 = vrsqrt.pop %v897
    %v906 = vrsqrt.pop %v898
    %v907 = vrsqrt.pop %v899
    %v908 = vrsqrt.pop %v900
    %v909 = vrsqrt.pop %v901
    %v910 = vrsqrt.pop %v902
    %v911 = vrsqrt.pop %v903
    %v912 = vrsqrt.pop %v904
    %v921 = vcombine.low %v905, %v906
    %v922 = vcombine.low %v907, %v908
    %v924 = vunpack.c.l.s4 1983009808
    %v925 = vunpack.c.0.s8 %v924
    %v926 = vlaneseq
    %v927 = vshrl.u32 %v926, 7
    %v928 = vsub.s32 %v925, %v927
    %v929 = vrot.slane %v921, %v928
    %v931 = vunpack.c.l.s4 1983009808
    %v932 = vunpack.c.0.s8 %v931
    %v933 = vlaneseq
    %v934 = vshrl.u32 %v933, 7
    %v935 = vsub.s32 %v932, %v934
    %v936 = vrot.slane %v922, %v935
    %v937 = vcombine.low %v929, %v936
    %v938 = vcombine.low %v909, %v910
    %v939 = vcombine.low %v911, %v912
    %v941 = vunpack.c.l.s4 1983009808
    %v942 = vunpack.c.0.s8 %v941
    %v943 = vlaneseq
    %v944 = vshrl.u32 %v943, 7
    %v945 = vsub.s32 %v942, %v944
    %v946 = vrot.slane %v938, %v945
    %v948 = vunpack.c.l.s4 1983009808
    %v949 = vunpack.c.0.s8 %v948
    %v950 = vlaneseq
    %v951 = vshrl.u32 %v950, 7
    %v952 = vsub.s32 %v949, %v951
    %v953 = vrot.slane %v939, %v952
    %v954 = vcombine.low %v946, %v953
    %v957 = vmul.f32 %v670, %v937
    %v958 = vmul.f32 %v671, %v954
    %v961 = vlaneseq
    %v962 = vshrl.u32 %v961, 7
    %v963 = vsub.s32 0, %v962
    %v964 = vrot.slane %v957, %v963
    %v965 = vlaneseq
    %v966 = vshrl.u32 %v965, 7
    %v967 = vsub.s32 2, %v966
    %v968 = vrot.slane %v957, %v967
    %v969 = vlaneseq
    %v970 = vshrl.u32 %v969, 7
    %v971 = vsub.s32 4, %v970
    %v972 = vrot.slane %v957, %v971
    %v973 = vlaneseq
    %v974 = vshrl.u32 %v973, 7
    %v975 = vsub.s32 6, %v974
    %v976 = vrot.slane %v957, %v975
    %v977 = vlaneseq
    %v978 = vshrl.u32 %v977, 7
    %v979 = vsub.s32 0, %v978
    %v980 = vrot.slane %v958, %v979
    %v981 = vlaneseq
    %v982 = vshrl.u32 %v981, 7
    %v983 = vsub.s32 2, %v982
    %v984 = vrot.slane %v958, %v983
    %v985 = vlaneseq
    %v986 = vshrl.u32 %v985, 7
    %v987 = vsub.s32 4, %v986
    %v988 = vrot.slane %v958, %v987
    %v989 = vlaneseq
    %v990 = vshrl.u32 %v989, 7
    %v991 = vsub.s32 6, %v990
    %v992 = vrot.slane %v958, %v991
    %v1001 = vlaneseq
    %v1002 = vshrl.u32 %v1001, 7
    %v1003 = vsub.s32 0, %v1002
    %v1004 = vrot.slane %v964, %v1003
    %v1005 = vlaneseq
    %v1006 = vshrl.u32 %v1005, 7
    %v1007 = vsub.s32 0, %v1006
    %v1008 = vrot.slane %v968, %v1007
    %v1009 = vlaneseq
    %v1010 = vshrl.u32 %v1009, 7
    %v1011 = vsub.s32 0, %v1010
    %v1012 = vrot.slane %v972, %v1011
    %v1013 = vlaneseq
    %v1014 = vshrl.u32 %v1013, 7
    %v1015 = vsub.s32 0, %v1014
    %v1016 = vrot.slane %v976, %v1015
    %v1017 = vlaneseq
    %v1018 = vshrl.u32 %v1017, 7
    %v1019 = vsub.s32 0, %v1018
    %v1020 = vrot.slane %v980, %v1019
    %v1021 = vlaneseq
    %v1022 = vshrl.u32 %v1021, 7
    %v1023 = vsub.s32 0, %v1022
    %v1024 = vrot.slane %v984, %v1023
    %v1025 = vlaneseq
    %v1026 = vshrl.u32 %v1025, 7
    %v1027 = vsub.s32 0, %v1026
    %v1028 = vrot.slane %v988, %v1027
    %v1029 = vlaneseq
    %v1030 = vshrl.u32 %v1029, 7
    %v1031 = vsub.s32 0, %v1030
    %v1032 = vrot.slane %v992, %v1031
    %v1033 = vmul.f32 %v753, %v1004
    %v1034 = vmul.f32 %v754, %v1008
    %v1035 = vmul.f32 %v755, %v1012
    %v1036 = vmul.f32 %v756, %v1016
    %v1037 = vmul.f32 %v757, %v1020
    %v1038 = vmul.f32 %v758, %v1024
    %v1039 = vmul.f32 %v759, %v1028
    %v1040 = vmul.f32 %v760, %v1032
    %v1041 = vmul.f32 %v761, %v1004
    %v1042 = vmul.f32 %v762, %v1008
    %v1043 = vmul.f32 %v763, %v1012
    %v1044 = vmul.f32 %v764, %v1016
    %v1045 = vmul.f32 %v765, %v1020
    %v1046 = vmul.f32 %v766, %v1024
    %v1047 = vmul.f32 %v767, %v1028
    %v1048 = vmul.f32 %v768, %v1032
    %v1049 = vmul.f32 %v769, %v1004
    %v1050 = vmul.f32 %v770, %v1008
    %v1051 = vmul.f32 %v771, %v1012
    %v1052 = vmul.f32 %v772, %v1016
    %v1053 = vmul.f32 %v773, %v1020
    %v1054 = vmul.f32 %v774, %v1024
    %v1055 = vmul.f32 %v775, %v1028
    %v1056 = vmul.f32 %v776, %v1032
    %v1057 = vmul.f32 %v777, %v1004
    %v1058 = vmul.f32 %v778, %v1008
    %v1059 = vmul.f32 %v779, %v1012
    %v1060 = vmul.f32 %v780, %v1016
    %v1061 = vmul.f32 %v781, %v1020
    %v1062 = vmul.f32 %v782, %v1024
    %v1063 = vmul.f32 %v783, %v1028
    %v1064 = vmul.f32 %v784, %v1032
    %v1067 = vlaneseq
    %v1068 = vshrl.u32 %v1067, 7
    %v1069 = vsub.s32 1, %v1068
    %v1070 = vrot.slane %v670, %v1069
    %v1071 = vlaneseq
    %v1072 = vshrl.u32 %v1071, 7
    %v1073 = vsub.s32 3, %v1072
    %v1074 = vrot.slane %v670, %v1073
    %v1075 = vlaneseq
    %v1076 = vshrl.u32 %v1075, 7
    %v1077 = vsub.s32 5, %v1076
    %v1078 = vrot.slane %v670, %v1077
    %v1079 = vlaneseq
    %v1080 = vshrl.u32 %v1079, 7
    %v1081 = vsub.s32 7, %v1080
    %v1082 = vrot.slane %v670, %v1081
    %v1083 = vlaneseq
    %v1084 = vshrl.u32 %v1083, 7
    %v1085 = vsub.s32 1, %v1084
    %v1086 = vrot.slane %v671, %v1085
    %v1087 = vlaneseq
    %v1088 = vshrl.u32 %v1087, 7
    %v1089 = vsub.s32 3, %v1088
    %v1090 = vrot.slane %v671, %v1089
    %v1091 = vlaneseq
    %v1092 = vshrl.u32 %v1091, 7
    %v1093 = vsub.s32 5, %v1092
    %v1094 = vrot.slane %v671, %v1093
    %v1095 = vlaneseq
    %v1096 = vshrl.u32 %v1095, 7
    %v1097 = vsub.s32 7, %v1096
    %v1098 = vrot.slane %v671, %v1097
    %v1107 = vlaneseq
    %v1108 = vshrl.u32 %v1107, 7
    %v1109 = vsub.s32 1, %v1108
    %v1110 = vrot.slane %v1070, %v1109
    %v1111 = vlaneseq
    %v1112 = vshrl.u32 %v1111, 7
    %v1113 = vsub.s32 1, %v1112
    %v1114 = vrot.slane %v1074, %v1113
    %v1115 = vlaneseq
    %v1116 = vshrl.u32 %v1115, 7
    %v1117 = vsub.s32 1, %v1116
    %v1118 = vrot.slane %v1078, %v1117
    %v1119 = vlaneseq
    %v1120 = vshrl.u32 %v1119, 7
    %v1121 = vsub.s32 1, %v1120
    %v1122 = vrot.slane %v1082, %v1121
    %v1123 = vlaneseq
    %v1124 = vshrl.u32 %v1123, 7
    %v1125 = vsub.s32 1, %v1124
    %v1126 = vrot.slane %v1086, %v1125
    %v1127 = vlaneseq
    %v1128 = vshrl.u32 %v1127, 7
    %v1129 = vsub.s32 1, %v1128
    %v1130 = vrot.slane %v1090, %v1129
    %v1131 = vlaneseq
    %v1132 = vshrl.u32 %v1131, 7
    %v1133 = vsub.s32 1, %v1132
    %v1134 = vrot.slane %v1094, %v1133
    %v1135 = vlaneseq
    %v1136 = vshrl.u32 %v1135, 7
    %v1137 = vsub.s32 1, %v1136
    %v1138 = vrot.slane %v1098, %v1137
    %v1139 = vadd.f32 %v1033, %v1110
    %v1140 = vadd.f32 %v1034, %v1114
    %v1141 = vadd.f32 %v1035, %v1118
    %v1142 = vadd.f32 %v1036, %v1122
    %v1143 = vadd.f32 %v1037, %v1126
    %v1144 = vadd.f32 %v1038, %v1130
    %v1145 = vadd.f32 %v1039, %v1134
    %v1146 = vadd.f32 %v1040, %v1138
    %v1147 = vadd.f32 %v1041, %v1110
    %v1148 = vadd.f32 %v1042, %v1114
    %v1149 = vadd.f32 %v1043, %v1118
    %v1150 = vadd.f32 %v1044, %v1122
    %v1151 = vadd.f32 %v1045, %v1126
    %v1152 = vadd.f32 %v1046, %v1130
    %v1153 = vadd.f32 %v1047, %v1134
    %v1154 = vadd.f32 %v1048, %v1138
    %v1155 = vadd.f32 %v1049, %v1110
    %v1156 = vadd.f32 %v1050, %v1114
    %v1157 = vadd.f32 %v1051, %v1118
    %v1158 = vadd.f32 %v1052, %v1122
    %v1159 = vadd.f32 %v1053, %v1126
    %v1160 = vadd.f32 %v1054, %v1130
    %v1161 = vadd.f32 %v1055, %v1134
    %v1162 = vadd.f32 %v1056, %v1138
    %v1163 = vadd.f32 %v1057, %v1110
    %v1164 = vadd.f32 %v1058, %v1114
    %v1165 = vadd.f32 %v1059, %v1118
    %v1166 = vadd.f32 %v1060, %v1122
    %v1167 = vadd.f32 %v1061, %v1126
    %v1168 = vadd.f32 %v1062, %v1130
    %v1169 = vadd.f32 %v1063, %v1134
    %v1170 = vadd.f32 %v1064, %v1138
    %v1171 = vmax.f32 %v1139, 0.0
    %v1172 = vmax.f32 %v1140, 0.0
    %v1173 = vmax.f32 %v1141, 0.0
    %v1174 = vmax.f32 %v1142, 0.0
    %v1175 = vmax.f32 %v1143, 0.0
    %v1176 = vmax.f32 %v1144, 0.0
    %v1177 = vmax.f32 %v1145, 0.0
    %v1178 = vmax.f32 %v1146, 0.0
    %v1179 = vmax.f32 %v1147, 0.0
    %v1180 = vmax.f32 %v1148, 0.0
    %v1181 = vmax.f32 %v1149, 0.0
    %v1182 = vmax.f32 %v1150, 0.0
    %v1183 = vmax.f32 %v1151, 0.0
    %v1184 = vmax.f32 %v1152, 0.0
    %v1185 = vmax.f32 %v1153, 0.0
    %v1186 = vmax.f32 %v1154, 0.0
    %v1187 = vmax.f32 %v1155, 0.0
    %v1188 = vmax.f32 %v1156, 0.0
    %v1189 = vmax.f32 %v1157, 0.0
    %v1190 = vmax.f32 %v1158, 0.0
    %v1191 = vmax.f32 %v1159, 0.0
    %v1192 = vmax.f32 %v1160, 0.0
    %v1193 = vmax.f32 %v1161, 0.0
    %v1194 = vmax.f32 %v1162, 0.0
    %v1195 = vmax.f32 %v1163, 0.0
    %v1196 = vmax.f32 %v1164, 0.0
    %v1197 = vmax.f32 %v1165, 0.0
    %v1198 = vmax.f32 %v1166, 0.0
    %v1199 = vmax.f32 %v1167, 0.0
    %v1200 = vmax.f32 %v1168, 0.0
    %v1201 = vmax.f32 %v1169, 0.0
    %v1202 = vmax.f32 %v1170, 0.0
    %v1203 = vld [vmem:[%s5] sm:$0xff]
    %v1204 = vld [vmem:[%s5 + $0x8] sm:$0xff]
    %v1205 = vld [vmem:[%s5 + $0x10] sm:$0xff]
    %v1206 = vld [vmem:[%s5 + $0x18] sm:$0xff]
    %v1207 = vld [vmem:[%s3] sm:$0xff]
    %v1208 = vld [vmem:[%s3 + $0x8] sm:$0xff]
    %v1209 = vld [vmem:[%s3 + $0x10] sm:$0xff]
    %v1210 = vld [vmem:[%s3 + $0x18] sm:$0xff]
    %v1211 = vld [vmem:[%s3 + $0x20] sm:$0xff]
    %v1212 = vld [vmem:[%s3 + $0x28] sm:$0xff]
    %v1213 = vld [vmem:[%s3 + $0x30] sm:$0xff]
    %v1214 = vld [vmem:[%s3 + $0x38] sm:$0xff]
    %v1215 = vld [vmem:[%s3 + $0x40] sm:$0xff]
    %v1216 = vld [vmem:[%s3 + $0x48] sm:$0xff]
    %v1217 = vld [vmem:[%s3 + $0x50] sm:$0xff]
    %v1218 = vld [vmem:[%s3 + $0x58] sm:$0xff]
    %v1219 = vld [vmem:[%s3 + $0x60] sm:$0xff]
    %v1220 = vld [vmem:[%s3 + $0x68] sm:$0xff]
    %v1221 = vld [vmem:[%s3 + $0x70] sm:$0xff]
    %v1222 = vld [vmem:[%s3 + $0x78] sm:$0xff]
    %v1223 = vld [vmem:[%s3 + $0x80] sm:$0xff]
    %v1224 = vld [vmem:[%s3 + $0x88] sm:$0xff]
    %v1225 = vld [vmem:[%s3 + $0x90] sm:$0xff]
    %v1226 = vld [vmem:[%s3 + $0x98] sm:$0xff]
    %v1227 = vld [vmem:[%s3 + $0xa0] sm:$0xff]
    %v1228 = vld [vmem:[%s3 + $0xa8] sm:$0xff]
    %v1229 = vld [vmem:[%s3 + $0xb0] sm:$0xff]
    %v1230 = vld [vmem:[%s3 + $0xb8] sm:$0xff]
    %v1231 = vld [vmem:[%s3 + $0xc0] sm:$0xff]
    %v1232 = vld [vmem:[%s3 + $0xc8] sm:$0xff]
    %v1233 = vld [vmem:[%s3 + $0xd0] sm:$0xff]
    %v1234 = vld [vmem:[%s3 + $0xd8] sm:$0xff]
    %v1235 = vld [vmem:[%s3 + $0xe0] sm:$0xff]
    %v1236 = vld [vmem:[%s3 + $0xe8] sm:$0xff]
    %v1237 = vld [vmem:[%s3 + $0xf0] sm:$0xff]
    %v1238 = vld [vmem:[%s3 + $0xf8] sm:$0xff]
    %v1239 = vld [vmem:[%s3 + $0x100] sm:$0xff]
    %v1240 = vld [vmem:[%s3 + $0x108] sm:$0xff]
    %v1241 = vld [vmem:[%s3 + $0x110] sm:$0xff]
    %v1242 = vld [vmem:[%s3 + $0x118] sm:$0xff]
    %v1243 = vld [vmem:[%s3 + $0x120] sm:$0xff]
    %v1244 = vld [vmem:[%s3 + $0x128] sm:$0xff]
    %v1245 = vld [vmem:[%s3 + $0x130] sm:$0xff]
    %v1246 = vld [vmem:[%s3 + $0x138] sm:$0xff]
    %v1247 = vld [vmem:[%s3 + $0x140] sm:$0xff]
    %v1248 = vld [vmem:[%s3 + $0x148] sm:$0xff]
    %v1249 = vld [vmem:[%s3 + $0x150] sm:$0xff]
    %v1250 = vld [vmem:[%s3 + $0x158] sm:$0xff]
    %v1251 = vld [vmem:[%s3 + $0x160] sm:$0xff]
    %v1252 = vld [vmem:[%s3 + $0x168] sm:$0xff]
    %v1253 = vld [vmem:[%s3 + $0x170] sm:$0xff]
    %v1254 = vld [vmem:[%s3 + $0x178] sm:$0xff]
    %v1255 = vld [vmem:[%s3 + $0x180] sm:$0xff]
    %v1256 = vld [vmem:[%s3 + $0x188] sm:$0xff]
    %v1257 = vld [vmem:[%s3 + $0x190] sm:$0xff]
    %v1258 = vld [vmem:[%s3 + $0x198] sm:$0xff]
    %v1259 = vld [vmem:[%s3 + $0x1a0] sm:$0xff]
    %v1260 = vld [vmem:[%s3 + $0x1a8] sm:$0xff]
    %v1261 = vld [vmem:[%s3 + $0x1b0] sm:$0xff]
    %v1262 = vld [vmem:[%s3 + $0x1b8] sm:$0xff]
    %v1263 = vld [vmem:[%s3 + $0x1c0] sm:$0xff]
    %v1264 = vld [vmem:[%s3 + $0x1c8] sm:$0xff]
    %v1265 = vld [vmem:[%s3 + $0x1d0] sm:$0xff]
    %v1266 = vld [vmem:[%s3 + $0x1d8] sm:$0xff]
    %v1267 = vld [vmem:[%s3 + $0x1e0] sm:$0xff]
    %v1268 = vld [vmem:[%s3 + $0x1e8] sm:$0xff]
    %v1269 = vld [vmem:[%s3 + $0x1f0] sm:$0xff]
    %v1270 = vld [vmem:[%s3 + $0x1f8] sm:$0xff]
    %v1271 = vld [vmem:[%s3 + $0x200] sm:$0xff]
    %v1272 = vld [vmem:[%s3 + $0x208] sm:$0xff]
    %v1273 = vld [vmem:[%s3 + $0x210] sm:$0xff]
    %v1274 = vld [vmem:[%s3 + $0x218] sm:$0xff]
    %v1275 = vld [vmem:[%s3 + $0x220] sm:$0xff]
    %v1276 = vld [vmem:[%s3 + $0x228] sm:$0xff]
    %v1277 = vld [vmem:[%s3 + $0x230] sm:$0xff]
    %v1278 = vld [vmem:[%s3 + $0x238] sm:$0xff]
    %v1279 = vld [vmem:[%s3 + $0x240] sm:$0xff]
    %v1280 = vld [vmem:[%s3 + $0x248] sm:$0xff]
    %v1281 = vld [vmem:[%s3 + $0x250] sm:$0xff]
    %v1282 = vld [vmem:[%s3 + $0x258] sm:$0xff]
    %v1283 = vld [vmem:[%s3 + $0x260] sm:$0xff]
    %v1284 = vld [vmem:[%s3 + $0x268] sm:$0xff]
    %v1285 = vld [vmem:[%s3 + $0x270] sm:$0xff]
    %v1286 = vld [vmem:[%s3 + $0x278] sm:$0xff]
    %v1287 = vld [vmem:[%s3 + $0x280] sm:$0xff]
    %v1288 = vld [vmem:[%s3 + $0x288] sm:$0xff]
    %v1289 = vld [vmem:[%s3 + $0x290] sm:$0xff]
    %v1290 = vld [vmem:[%s3 + $0x298] sm:$0xff]
    %v1291 = vld [vmem:[%s3 + $0x2a0] sm:$0xff]
    %v1292 = vld [vmem:[%s3 + $0x2a8] sm:$0xff]
    %v1293 = vld [vmem:[%s3 + $0x2b0] sm:$0xff]
    %v1294 = vld [vmem:[%s3 + $0x2b8] sm:$0xff]
    %v1295 = vld [vmem:[%s3 + $0x2c0] sm:$0xff]
    %v1296 = vld [vmem:[%s3 + $0x2c8] sm:$0xff]
    %v1297 = vld [vmem:[%s3 + $0x2d0] sm:$0xff]
    %v1298 = vld [vmem:[%s3 + $0x2d8] sm:$0xff]
    %v1299 = vld [vmem:[%s3 + $0x2e0] sm:$0xff]
    %v1300 = vld [vmem:[%s3 + $0x2e8] sm:$0xff]
    %v1301 = vld [vmem:[%s3 + $0x2f0] sm:$0xff]
    %v1302 = vld [vmem:[%s3 + $0x2f8] sm:$0xff]
    %v1303 = vld [vmem:[%s3 + $0x300] sm:$0xff]
    %v1304 = vld [vmem:[%s3 + $0x308] sm:$0xff]
    %v1305 = vld [vmem:[%s3 + $0x310] sm:$0xff]
    %v1306 = vld [vmem:[%s3 + $0x318] sm:$0xff]
    %v1307 = vld [vmem:[%s3 + $0x320] sm:$0xff]
    %v1308 = vld [vmem:[%s3 + $0x328] sm:$0xff]
    %v1309 = vld [vmem:[%s3 + $0x330] sm:$0xff]
    %v1310 = vld [vmem:[%s3 + $0x338] sm:$0xff]
    %v1311 = vld [vmem:[%s3 + $0x340] sm:$0xff]
    %v1312 = vld [vmem:[%s3 + $0x348] sm:$0xff]
    %v1313 = vld [vmem:[%s3 + $0x350] sm:$0xff]
    %v1314 = vld [vmem:[%s3 + $0x358] sm:$0xff]
    %v1315 = vld [vmem:[%s3 + $0x360] sm:$0xff]
    %v1316 = vld [vmem:[%s3 + $0x368] sm:$0xff]
    %v1317 = vld [vmem:[%s3 + $0x370] sm:$0xff]
    %v1318 = vld [vmem:[%s3 + $0x378] sm:$0xff]
    %v1319 = vld [vmem:[%s3 + $0x380] sm:$0xff]
    %v1320 = vld [vmem:[%s3 + $0x388] sm:$0xff]
    %v1321 = vld [vmem:[%s3 + $0x390] sm:$0xff]
    %v1322 = vld [vmem:[%s3 + $0x398] sm:$0xff]
    %v1323 = vld [vmem:[%s3 + $0x3a0] sm:$0xff]
    %v1324 = vld [vmem:[%s3 + $0x3a8] sm:$0xff]
    %v1325 = vld [vmem:[%s3 + $0x3b0] sm:$0xff]
    %v1326 = vld [vmem:[%s3 + $0x3b8] sm:$0xff]
    %v1327 = vld [vmem:[%s3 + $0x3c0] sm:$0xff]
    %v1328 = vld [vmem:[%s3 + $0x3c8] sm:$0xff]
    %v1329 = vld [vmem:[%s3 + $0x3d0] sm:$0xff]
    %v1330 = vld [vmem:[%s3 + $0x3d8] sm:$0xff]
    %v1331 = vld [vmem:[%s3 + $0x3e0] sm:$0xff]
    %v1332 = vld [vmem:[%s3 + $0x3e8] sm:$0xff]
    %v1333 = vld [vmem:[%s3 + $0x3f0] sm:$0xff]
    %v1334 = vld [vmem:[%s3 + $0x3f8] sm:$0xff]
    %1335 = vmatprep.subr.mxu0 0.0
    %1336 = vmatpush1.msra.mxu0 %v1222
    %1337 = vmatprep.subr.mxu0 0.0
    %1338 = vmatpush1.msra.mxu0 %v1221
    %1339 = vmatprep.subr.mxu0 0.0
    %1340 = vmatpush1.msra.mxu0 %v1220
    %1341 = vmatprep.subr.mxu0 0.0
    %1342 = vmatpush1.msra.mxu0 %v1219
    %1343 = vmatprep.subr.mxu0 0.0
    %1344 = vmatpush1.msra.mxu0 %v1218
    %1345 = vmatprep.subr.mxu0 0.0
    %1346 = vmatpush1.msra.mxu0 %v1217
    %1347 = vmatprep.subr.mxu0 0.0
    %1348 = vmatpush1.msra.mxu0 %v1216
    %1349 = vmatprep.subr.mxu0 0.0
    %1350 = vmatpush1.msra.mxu0 %v1215
    %1351 = vmatprep.subr.mxu0 0.0
    %1352 = vmatpush1.msra.mxu0 %v1214
    %1353 = vmatprep.subr.mxu0 0.0
    %1354 = vmatpush1.msra.mxu0 %v1213
    %1355 = vmatprep.subr.mxu0 0.0
    %1356 = vmatpush1.msra.mxu0 %v1212
    %1357 = vmatprep.subr.mxu0 0.0
    %1358 = vmatpush1.msra.mxu0 %v1211
    %1359 = vmatprep.subr.mxu0 0.0
    %1360 = vmatpush1.msra.mxu0 %v1210
    %1361 = vmatprep.subr.mxu0 0.0
    %1362 = vmatpush1.msra.mxu0 %v1209
    %1363 = vmatprep.subr.mxu0 0.0
    %1364 = vmatpush1.msra.mxu0 %v1208
    %1365 = vmatprep.subr.mxu0 0.0
    %1366 = vmatpush1.msra.mxu0 %v1207
    %1367 = vmatprep.subr.mxu0 0.0
    %1368 = vmatpush2.msra.mxu0 %v1238
    %1369 = vmatprep.subr.mxu0 0.0
    %1370 = vmatpush2.msra.mxu0 %v1237
    %1371 = vmatprep.subr.mxu0 0.0
    %1372 = vmatpush2.msra.mxu0 %v1236
    %1373 = vmatprep.subr.mxu0 0.0
    %1374 = vmatpush2.msra.mxu0 %v1235
    %1375 = vmatprep.subr.mxu0 0.0
    %1376 = vmatpush2.msra.mxu0 %v1234
    %1377 = vmatprep.subr.mxu0 0.0
    %1378 = vmatpush2.msra.mxu0 %v1233
    %1379 = vmatprep.subr.mxu0 0.0
    %1380 = vmatpush2.msra.mxu0 %v1232
    %1381 = vmatprep.subr.mxu0 0.0
    %1382 = vmatpush2.msra.mxu0 %v1231
    %1383 = vmatprep.subr.mxu0 0.0
    %1384 = vmatpush2.msra.mxu0 %v1230
    %1385 = vmatprep.subr.mxu0 0.0
    %1386 = vmatpush2.msra.mxu0 %v1229
    %1387 = vmatprep.subr.mxu0 0.0
    %1388 = vmatpush2.msra.mxu0 %v1228
    %1389 = vmatprep.subr.mxu0 0.0
    %1390 = vmatpush2.msra.mxu0 %v1227
    %1391 = vmatprep.subr.mxu0 0.0
    %1392 = vmatpush2.msra.mxu0 %v1226
    %1393 = vmatprep.subr.mxu0 0.0
    %1394 = vmatpush2.msra.mxu0 %v1225
    %1395 = vmatprep.subr.mxu0 0.0
    %1396 = vmatpush2.msra.mxu0 %v1224
    %1397 = vmatprep.subr.mxu0 0.0
    %1398 = vmatpush2.msra.mxu0 %v1223
    %1399 = vmatprep.mubr.f32.mxu0 %v1172
    %1400 = vmatmul.mubr.f32.gmra.mxu0 %v1171
    %v1401 = vpop.f32.mrf.mxu0
    %v1402 = vadd.f32 0.0, %v1401
    %v1403 = vpop.f32.mrf.mxu0
    %1404 = vmatprep.mubr.f32.mxu0 %v1180
    %1405 = vmatmul.mubr.f32.gmra.mxu0 %v1179
    %v1406 = vpop.f32.mrf.mxu0
    %v1407 = vadd.f32 0.0, %v1406
    %v1408 = vpop.f32.mrf.mxu0
    %1409 = vmatprep.mubr.f32.mxu0 %v1188
    %1410 = vmatmul.mubr.f32.gmra.mxu0 %v1187
    %v1411 = vpop.f32.mrf.mxu0
    %v1412 = vadd.f32 0.0, %v1411
    %v1413 = vpop.f32.mrf.mxu0
    %1414 = vmatprep.mubr.f32.mxu0 %v1196
    %1415 = vmatmul.mubr.f32.gmra.mxu0 %v1195
    %v1416 = vpop.f32.mrf.mxu0
    %v1417 = vadd.f32 0.0, %v1416
    %v1418 = vpop.f32.mrf.mxu0
    %1419 = vdwg.mxu0
    %1420 = vmatprep.subr.mxu0 0.0
    %1421 = vmatpush1.msra.mxu0 %v1254
    %1422 = vmatprep.subr.mxu0 0.0
    %1423 = vmatpush1.msra.mxu0 %v1253
    %1424 = vmatprep.subr.mxu0 0.0
    %1425 = vmatpush1.msra.mxu0 %v1252
    %1426 = vmatprep.subr.mxu0 0.0
    %1427 = vmatpush1.msra.mxu0 %v1251
    %1428 = vmatprep.subr.mxu0 0.0
    %1429 = vmatpush1.msra.mxu0 %v1250
    %1430 = vmatprep.subr.mxu0 0.0
    %1431 = vmatpush1.msra.mxu0 %v1249
    %1432 = vmatprep.subr.mxu0 0.0
    %1433 = vmatpush1.msra.mxu0 %v1248
    %1434 = vmatprep.subr.mxu0 0.0
    %1435 = vmatpush1.msra.mxu0 %v1247
    %1436 = vmatprep.subr.mxu0 0.0
    %1437 = vmatpush1.msra.mxu0 %v1246
    %1438 = vmatprep.subr.mxu0 0.0
    %1439 = vmatpush1.msra.mxu0 %v1245
    %1440 = vmatprep.subr.mxu0 0.0
    %1441 = vmatpush1.msra.mxu0 %v1244
    %1442 = vmatprep.subr.mxu0 0.0
    %1443 = vmatpush1.msra.mxu0 %v1243
    %1444 = vmatprep.subr.mxu0 0.0
    %1445 = vmatpush1.msra.mxu0 %v1242
    %1446 = vmatprep.subr.mxu0 0.0
    %1447 = vmatpush1.msra.mxu0 %v1241
    %1448 = vmatprep.subr.mxu0 0.0
    %1449 = vmatpush1.msra.mxu0 %v1240
    %1450 = vmatprep.subr.mxu0 0.0
    %1451 = vmatpush1.msra.mxu0 %v1239
    %1452 = vmatprep.subr.mxu0 0.0
    %1453 = vmatpush2.msra.mxu0 %v1270
    %1454 = vmatprep.subr.mxu0 0.0
    %1455 = vmatpush2.msra.mxu0 %v1269
    %1456 = vmatprep.subr.mxu0 0.0
    %1457 = vmatpush2.msra.mxu0 %v1268
    %1458 = vmatprep.subr.mxu0 0.0
    %1459 = vmatpush2.msra.mxu0 %v1267
    %1460 = vmatprep.subr.mxu0 0.0
    %1461 = vmatpush2.msra.mxu0 %v1266
    %1462 = vmatprep.subr.mxu0 0.0
    %1463 = vmatpush2.msra.mxu0 %v1265
    %1464 = vmatprep.subr.mxu0 0.0
    %1465 = vmatpush2.msra.mxu0 %v1264
    %1466 = vmatprep.subr.mxu0 0.0
    %1467 = vmatpush2.msra.mxu0 %v1263
    %1468 = vmatprep.subr.mxu0 0.0
    %1469 = vmatpush2.msra.mxu0 %v1262
    %1470 = vmatprep.subr.mxu0 0.0
    %1471 = vmatpush2.msra.mxu0 %v1261
    %1472 = vmatprep.subr.mxu0 0.0
    %1473 = vmatpush2.msra.mxu0 %v1260
    %1474 = vmatprep.subr.mxu0 0.0
    %1475 = vmatpush2.msra.mxu0 %v1259
    %1476 = vmatprep.subr.mxu0 0.0
    %1477 = vmatpush2.msra.mxu0 %v1258
    %1478 = vmatprep.subr.mxu0 0.0
    %1479 = vmatpush2.msra.mxu0 %v1257
    %1480 = vmatprep.subr.mxu0 0.0
    %1481 = vmatpush2.msra.mxu0 %v1256
    %1482 = vmatprep.subr.mxu0 0.0
    %1483 = vmatpush2.msra.mxu0 %v1255
    %1484 = vmatprep.mubr.f32.mxu0 %v1174
    %1485 = vmatmul.mubr.f32.gmra.mxu0 %v1173
    %v1486 = vpop.f32.mrf.mxu0
    %v1487 = vadd.f32 %v1402, %v1486
    %v1488 = vpop.f32.mrf.mxu0
    %1489 = vmatprep.mubr.f32.mxu0 %v1182
    %1490 = vmatmul.mubr.f32.gmra.mxu0 %v1181
    %v1491 = vpop.f32.mrf.mxu0
    %v1492 = vadd.f32 %v1407, %v1491
    %v1493 = vpop.f32.mrf.mxu0
    %1494 = vmatprep.mubr.f32.mxu0 %v1190
    %1495 = vmatmul.mubr.f32.gmra.mxu0 %v1189
    %v1496 = vpop.f32.mrf.mxu0
    %v1497 = vadd.f32 %v1412, %v1496
    %v1498 = vpop.f32.mrf.mxu0
    %1499 = vmatprep.mubr.f32.mxu0 %v1198
    %1500 = vmatmul.mubr.f32.gmra.mxu0 %v1197
    %v1501 = vpop.f32.mrf.mxu0
    %v1502 = vadd.f32 %v1417, %v1501
    %v1503 = vpop.f32.mrf.mxu0
    %1504 = vdwg.mxu0
    %1505 = vmatprep.subr.mxu0 0.0
    %1506 = vmatpush1.msra.mxu0 %v1286
    %1507 = vmatprep.subr.mxu0 0.0
    %1508 = vmatpush1.msra.mxu0 %v1285
    %1509 = vmatprep.subr.mxu0 0.0
    %1510 = vmatpush1.msra.mxu0 %v1284
    %1511 = vmatprep.subr.mxu0 0.0
    %1512 = vmatpush1.msra.mxu0 %v1283
    %1513 = vmatprep.subr.mxu0 0.0
    %1514 = vmatpush1.msra.mxu0 %v1282
    %1515 = vmatprep.subr.mxu0 0.0
    %1516 = vmatpush1.msra.mxu0 %v1281
    %1517 = vmatprep.subr.mxu0 0.0
    %1518 = vmatpush1.msra.mxu0 %v1280
    %1519 = vmatprep.subr.mxu0 0.0
    %1520 = vmatpush1.msra.mxu0 %v1279
    %1521 = vmatprep.subr.mxu0 0.0
    %1522 = vmatpush1.msra.mxu0 %v1278
    %1523 = vmatprep.subr.mxu0 0.0
    %1524 = vmatpush1.msra.mxu0 %v1277
    %1525 = vmatprep.subr.mxu0 0.0
    %1526 = vmatpush1.msra.mxu0 %v1276
    %1527 = vmatprep.subr.mxu0 0.0
    %1528 = vmatpush1.msra.mxu0 %v1275
    %1529 = vmatprep.subr.mxu0 0.0
    %1530 = vmatpush1.msra.mxu0 %v1274
    %1531 = vmatprep.subr.mxu0 0.0
    %1532 = vmatpush1.msra.mxu0 %v1273
    %1533 = vmatprep.subr.mxu0 0.0
    %1534 = vmatpush1.msra.mxu0 %v1272
    %1535 = vmatprep.subr.mxu0 0.0
    %1536 = vmatpush1.msra.mxu0 %v1271
    %1537 = vmatprep.subr.mxu0 0.0
    %1538 = vmatpush2.msra.mxu0 %v1302
    %1539 = vmatprep.subr.mxu0 0.0
    %1540 = vmatpush2.msra.mxu0 %v1301
    %1541 = vmatprep.subr.mxu0 0.0
    %1542 = vmatpush2.msra.mxu0 %v1300
    %1543 = vmatprep.subr.mxu0 0.0
    %1544 = vmatpush2.msra.mxu0 %v1299
    %1545 = vmatprep.subr.mxu0 0.0
    %1546 = vmatpush2.msra.mxu0 %v1298
    %1547 = vmatprep.subr.mxu0 0.0
    %1548 = vmatpush2.msra.mxu0 %v1297
    %1549 = vmatprep.subr.mxu0 0.0
    %1550 = vmatpush2.msra.mxu0 %v1296
    %1551 = vmatprep.subr.mxu0 0.0
    %1552 = vmatpush2.msra.mxu0 %v1295
    %1553 = vmatprep.subr.mxu0 0.0
    %1554 = vmatpush2.msra.mxu0 %v1294
    %1555 = vmatprep.subr.mxu0 0.0
    %1556 = vmatpush2.msra.mxu0 %v1293
    %1557 = vmatprep.subr.mxu0 0.0
    %1558 = vmatpush2.msra.mxu0 %v1292
    %1559 = vmatprep.subr.mxu0 0.0
    %1560 = vmatpush2.msra.mxu0 %v1291
    %1561 = vmatprep.subr.mxu0 0.0
    %1562 = vmatpush2.msra.mxu0 %v1290
    %1563 = vmatprep.subr.mxu0 0.0
    %1564 = vmatpush2.msra.mxu0 %v1289
    %1565 = vmatprep.subr.mxu0 0.0
    %1566 = vmatpush2.msra.mxu0 %v1288
    %1567 = vmatprep.subr.mxu0 0.0
    %1568 = vmatpush2.msra.mxu0 %v1287
    %1569 = vmatprep.mubr.f32.mxu0 %v1176
    %1570 = vmatmul.mubr.f32.gmra.mxu0 %v1175
    %v1571 = vpop.f32.mrf.mxu0
    %v1572 = vadd.f32 %v1487, %v1571
    %v1573 = vpop.f32.mrf.mxu0
    %1574 = vmatprep.mubr.f32.mxu0 %v1184
    %1575 = vmatmul.mubr.f32.gmra.mxu0 %v1183
    %v1576 = vpop.f32.mrf.mxu0
    %v1577 = vadd.f32 %v1492, %v1576
    %v1578 = vpop.f32.mrf.mxu0
    %1579 = vmatprep.mubr.f32.mxu0 %v1192
    %1580 = vmatmul.mubr.f32.gmra.mxu0 %v1191
    %v1581 = vpop.f32.mrf.mxu0
    %v1582 = vadd.f32 %v1497, %v1581
    %v1583 = vpop.f32.mrf.mxu0
    %1584 = vmatprep.mubr.f32.mxu0 %v1200
    %1585 = vmatmul.mubr.f32.gmra.mxu0 %v1199
    %v1586 = vpop.f32.mrf.mxu0
    %v1587 = vadd.f32 %v1502, %v1586
    %v1588 = vpop.f32.mrf.mxu0
    %1589 = vdwg.mxu0
    %1590 = vmatprep.subr.mxu0 0.0
    %1591 = vmatpush1.msra.mxu0 %v1318
    %1592 = vmatprep.subr.mxu0 0.0
    %1593 = vmatpush1.msra.mxu0 %v1317
    %1594 = vmatprep.subr.mxu0 0.0
    %1595 = vmatpush1.msra.mxu0 %v1316
    %1596 = vmatprep.subr.mxu0 0.0
    %1597 = vmatpush1.msra.mxu0 %v1315
    %1598 = vmatprep.subr.mxu0 0.0
    %1599 = vmatpush1.msra.mxu0 %v1314
    %1600 = vmatprep.subr.mxu0 0.0
    %1601 = vmatpush1.msra.mxu0 %v1313
    %1602 = vmatprep.subr.mxu0 0.0
    %1603 = vmatpush1.msra.mxu0 %v1312
    %1604 = vmatprep.subr.mxu0 0.0
    %1605 = vmatpush1.msra.mxu0 %v1311
    %1606 = vmatprep.subr.mxu0 0.0
    %1607 = vmatpush1.msra.mxu0 %v1310
    %1608 = vmatprep.subr.mxu0 0.0
    %1609 = vmatpush1.msra.mxu0 %v1309
    %1610 = vmatprep.subr.mxu0 0.0
    %1611 = vmatpush1.msra.mxu0 %v1308
    %1612 = vmatprep.subr.mxu0 0.0
    %1613 = vmatpush1.msra.mxu0 %v1307
    %1614 = vmatprep.subr.mxu0 0.0
    %1615 = vmatpush1.msra.mxu0 %v1306
    %1616 = vmatprep.subr.mxu0 0.0
    %1617 = vmatpush1.msra.mxu0 %v1305
    %1618 = vmatprep.subr.mxu0 0.0
    %1619 = vmatpush1.msra.mxu0 %v1304
    %1620 = vmatprep.subr.mxu0 0.0
    %1621 = vmatpush1.msra.mxu0 %v1303
    %1622 = vmatprep.subr.mxu0 0.0
    %1623 = vmatpush2.msra.mxu0 %v1334
    %1624 = vmatprep.subr.mxu0 0.0
    %1625 = vmatpush2.msra.mxu0 %v1333
    %1626 = vmatprep.subr.mxu0 0.0
    %1627 = vmatpush2.msra.mxu0 %v1332
    %1628 = vmatprep.subr.mxu0 0.0
    %1629 = vmatpush2.msra.mxu0 %v1331
    %1630 = vmatprep.subr.mxu0 0.0
    %1631 = vmatpush2.msra.mxu0 %v1330
    %1632 = vmatprep.subr.mxu0 0.0
    %1633 = vmatpush2.msra.mxu0 %v1329
    %1634 = vmatprep.subr.mxu0 0.0
    %1635 = vmatpush2.msra.mxu0 %v1328
    %1636 = vmatprep.subr.mxu0 0.0
    %1637 = vmatpush2.msra.mxu0 %v1327
    %1638 = vmatprep.subr.mxu0 0.0
    %1639 = vmatpush2.msra.mxu0 %v1326
    %1640 = vmatprep.subr.mxu0 0.0
    %1641 = vmatpush2.msra.mxu0 %v1325
    %1642 = vmatprep.subr.mxu0 0.0
    %1643 = vmatpush2.msra.mxu0 %v1324
    %1644 = vmatprep.subr.mxu0 0.0
    %1645 = vmatpush2.msra.mxu0 %v1323
    %1646 = vmatprep.subr.mxu0 0.0
    %1647 = vmatpush2.msra.mxu0 %v1322
    %1648 = vmatprep.subr.mxu0 0.0
    %1649 = vmatpush2.msra.mxu0 %v1321
    %1650 = vmatprep.subr.mxu0 0.0
    %1651 = vmatpush2.msra.mxu0 %v1320
    %1652 = vmatprep.subr.mxu0 0.0
    %1653 = vmatpush2.msra.mxu0 %v1319
    %1654 = vmatprep.mubr.f32.mxu0 %v1178
    %1655 = vmatmul.mubr.f32.gmra.mxu0 %v1177
    %v1656 = vpop.f32.mrf.mxu0
    %v1657 = vadd.f32 %v1572, %v1656
    %v1658 = vpop.f32.mrf.mxu0
    %1659 = vmatprep.mubr.f32.mxu0 %v1186
    %1660 = vmatmul.mubr.f32.gmra.mxu0 %v1185
    %v1661 = vpop.f32.mrf.mxu0
    %v1662 = vadd.f32 %v1577, %v1661
    %v1663 = vpop.f32.mrf.mxu0
    %1664 = vmatprep.mubr.f32.mxu0 %v1194
    %1665 = vmatmul.mubr.f32.gmra.mxu0 %v1193
    %v1666 = vpop.f32.mrf.mxu0
    %v1667 = vadd.f32 %v1582, %v1666
    %v1668 = vpop.f32.mrf.mxu0
    %1669 = vmatprep.mubr.f32.mxu0 %v1202
    %1670 = vmatmul.mubr.f32.gmra.mxu0 %v1201
    %v1671 = vpop.f32.mrf.mxu0
    %v1672 = vadd.f32 %v1587, %v1671
    %v1673 = vpop.f32.mrf.mxu0
    %1674 = vdwg.mxu0
    %v1675 = vadd.f32 %v1203, %v1657
    %v1676 = vadd.f32 %v1204, %v1662
    %v1677 = vadd.f32 %v1205, %v1667
    %v1678 = vadd.f32 %v1206, %v1672
    %vm1679 = vcmask 130048
    %1680 = vst.msk [vmem:[%s5] sm:$0xff] %vm1679, %v1675
    %1681 = vst.msk [vmem:[%s5 + $0x8] sm:$0xff] %vm1679, %v1676
    %1682 = vst.msk [vmem:[%s5 + $0x10] sm:$0xff] %vm1679, %v1677
    %1683 = vst.msk [vmem:[%s5 + $0x18] sm:$0xff] %vm1679, %v1678
    // Predicated region
    $region30: #{tpu_custom_call.1} parent=1 // pred_check
      _
    $region31: #{tpu_custom_call.1} parent=1 // pred_check_branch
      %1685 = sbr.rel (0) target = $region33
    $region32: #{tpu_custom_call.1} parent=1 // pred_region
      _
    $region33: #{tpu_custom_call.1} parent=1 // pred_fallthru
      _
    // Predicated region
    $region34: #{tpu_custom_call.1} parent=1 // pred_check
      _
    $region35: #{tpu_custom_call.1} parent=1 // pred_check_branch
      %1687 = sbr.rel (0) target = $region37
    $region36: #{tpu_custom_call.1} parent=1 // pred_region
      _
    $region37: #{tpu_custom_call.1} parent=1 // pred_fallthru
      _
    %1688 = vsyncpa [#allocation3], 1

</llo_original>
